<compile_context>
chip_gen: v5e
topology: v5e:2x2
jax: 0.10.0
libtpu: 0.0.40
codegen_flags: <defaults>
</compile_context>

<pallas_src>
import functools

import jax
import jax.numpy as jnp
from jax import lax
from jax.experimental import pallas as pl
from jax.experimental.pallas import tpu as pltpu


def _layernorm(x, gamma, beta, eps=1e-5):
    mu = jnp.mean(x, axis=-1, keepdims=True)
    xc = x - mu
    var = jnp.mean(xc * xc, axis=-1, keepdims=True)
    return xc * lax.rsqrt(var + eps) * gamma + beta


def transformer_block_kernel(qhm_ref, khm_ref, vhm_ref, q_ref, bias_ref,
                             ka_ref, wov_ref, w1_ref, w2_ref, b1_ref, vecs_ref,
                             out_ref, *, tb, seq, heads, head_dim):
    TB, S, H, D = tb, seq, heads, head_dim
    B = H * TB                      # fused (head, batch) axis for batched attention

    # ---- head-major activations; merge (H, TB) into one batch axis (free) ----
    q3 = qhm_ref[...].reshape(B, S, D)      # bf16, raw query (Wq folded into ka)
    k3 = khm_ref[...].reshape(B, S, D)      # bf16, raw key
    v3 = vhm_ref[...].reshape(B, S, D)      # bf16, raw value (Wv folded into wov)

    # ---- K-side projection with the folded  ka = Wk^T Wq / sqrt(E)  ----------
    kp = jnp.dot(k3.reshape(B * S, D), ka_ref[...],
                 preferred_element_type=jnp.float32)
    kp3 = kp.astype(jnp.bfloat16).reshape(B, S, D)

    # ---- scores + softmax: all heads & batches in one batched MXU pass -------
    s = jnp.einsum('bqd,bkd->bqk', q3, kp3,
                   preferred_element_type=jnp.float32)          # (B, S, S) f32
    s4 = s.reshape(H, TB, S, S) + bias_ref[...][None]           # additive mask bias
    m = jnp.max(s4, axis=-1, keepdims=True)
    p = jnp.exp(s4 - m)
    inv = pl.reciprocal(jnp.sum(p, axis=-1, keepdims=True), approx=True)
    attn = (p * inv).astype(jnp.bfloat16).reshape(B, S, S)

    # TODO(synk): for long sequences, tile the KV axis with an online (flash)
    # softmax instead of materializing the (B, S, S) score block.

    # ---- attention context with raw V, then per-head accumulation straight
    #      through the fused (Wv^T Wo^T) output projection; the accumulator is
    #      lane-dense (TB*S, E), nothing is stored at lane width D. ------------
    ctx = jnp.einsum('bqk,bkd->bqd', attn, v3,
                     preferred_element_type=jnp.float32)         # (B, S, D)
    ctx = ctx.astype(jnp.bfloat16).reshape(H, TB * S, D)

    attn_out = jnp.dot(ctx[0], wov_ref[0], preferred_element_type=jnp.float32)
    for h in range(1, H):                                        # static, small
        attn_out = attn_out + jnp.dot(ctx[h], wov_ref[h],
                                      preferred_element_type=jnp.float32)
    attn_out = attn_out + vecs_ref[0:1, :]                       # + bo

    # ---- residual + norm1 (dropout == identity in eval) ----------------------
    x = _layernorm(attn_out + q_ref[...], vecs_ref[1:2, :], vecs_ref[2:3, :])

    # ---- feed-forward ---------------------------------------------------------
    hdn = jnp.maximum(
        jnp.dot(x.astype(jnp.bfloat16), w1_ref[...],
                preferred_element_type=jnp.float32) + b1_ref[...], 0.0)
    f = jnp.dot(hdn.astype(jnp.bfloat16), w2_ref[...],
                preferred_element_type=jnp.float32) + vecs_ref[3:4, :]

    # ---- residual + norm2 ------------------------------------------------------
    out = _layernorm(f + x, vecs_ref[4:5, :], vecs_ref[5:6, :])
    out_ref[...] = out.astype(out_ref.dtype)


def _largest_divisor_at_most(n, cap):
    cap = max(1, min(n, cap))
    for d in range(cap, 0, -1):
        if n % d == 0:
            return d
    return 1


def _physical_vmem_bytes():
    phys = 128 * 1024 * 1024
    try:
        cap = getattr(pltpu.get_tpu_info(), "vmem_capacity_bytes", None)
        if cap:
            phys = int(cap)
    except Exception:
        pass
    return phys


def _pick_tb(N, S, E, FE, H, vmem_budget, min_grid_steps):
    # rough per-batch-element working set per grid step
    per_tb = 4 * S * (5 * E + FE)                # f32 intermediates (attn_out, x, hidden, ...)
    per_tb += 2 * (4 * S * E) + 2 * (4 * S * E)  # double-buffered f32 query block + output block
    per_tb += 2 * (2 * S * 3 * E)                # double-buffered bf16 head-major q/k/v
    per_tb += 4 * S * S * (2 * H + 1)            # scores + probs (f32) + mask bias
    budget_cap = max(1, vmem_budget // max(per_tb, 1))
    grid_cap = max(1, N // min_grid_steps)       # keep >= min_grid_steps grid iterations
    tb = min(N, budget_cap, grid_cap)
    rows_pref = -(-128 // S)                     # prefer >=128 matmul rows per step
    tb = max(tb, min(N, grid_cap, rows_pref))
    return _largest_divisor_at_most(N, tb)


def transformer_block(value, key, query, mask, params, *, heads, tb=None,
                      weight_dtype=jnp.bfloat16):
    N, S, E = query.shape
    H = heads
    D = E // H
    wv, wk, wq, wo, bo, g1, be1, w1, b1, w2, b2, g2, be2 = params
    FE = w1.shape[0]
    f32 = jnp.float32

    phys_vmem = _physical_vmem_bytes()
    # ~48 MiB on v7x (64 MiB/core), ~96-100 MiB on v5e/v6e (128 MiB/core)
    vmem_limit = min((phys_vmem * 3) // 4, 100 * 1024 * 1024)
    min_grid_steps = 4 if phys_vmem <= 64 * 1024 * 1024 else 2   # v7x: 2 TCs/chip

    if tb is None:
        tb = _pick_tb(N, S, E, FE, H, vmem_limit // 3, min_grid_steps)
    assert N % tb == 0, "tb must divide the batch"

    # ---- folded weights (pure linear-map composition; same forward math) -----
    ka = (wk.T.astype(f32) @ wq.astype(f32) / jnp.sqrt(f32(E))).astype(weight_dtype)
    wov = jnp.kron(jnp.eye(H, dtype=f32), wv.T.astype(f32)) @ wo.T.astype(f32)
    wov3 = wov.reshape(H, D, E).astype(weight_dtype)             # per-head (D, E) blocks
    w1_t = w1.T.astype(weight_dtype)                             # (E, FE)
    w2_t = w2.T.astype(weight_dtype)                             # (FE, E)

    vecs = jnp.zeros((8, E), f32)                                # packed small vectors
    vecs = (vecs.at[0].set(bo).at[1].set(g1).at[2].set(be1)
                .at[3].set(b2).at[4].set(g2).at[5].set(be2))
    b1_2 = b1.reshape(1, FE).astype(f32)

    # ---- activation layouts (wrapper-side layout plumbing only) --------------
    def head_major(x):                       # (N, S, E) -> (H, N, S, D), bf16
        return x.reshape(N, S, H, D).transpose(2, 0, 1, 3).astype(jnp.bfloat16)

    q_hm = head_major(query)
    k_hm = head_major(key)
    v_hm = head_major(value)
    q2 = query.reshape(N * S, E).astype(f32)                     # f32 residual path
    bias = jnp.where(mask == 0, f32(-1e20), f32(0.0)).astype(f32)  # (N, S, S)

    kernel = functools.partial(transformer_block_kernel,
                               tb=tb, seq=S, heads=H, head_dim=D)

    hm_spec = pl.BlockSpec((H, tb, S, D), lambda n: (0, n, 0, 0))
    row_spec = pl.BlockSpec((tb * S, E), lambda n: (n, 0))
    bias_spec = pl.BlockSpec((tb, S, S), lambda n: (n, 0, 0))

    def const_spec(a):
        zeros = (0,) * a.ndim
        return pl.BlockSpec(a.shape, lambda n: zeros)

    # NOTE: constant-index weight blocks; if weight residency matters on v7x's
    # 64 MiB VMEM, add pipeline_mode=pl.Buffered(1) to these specs.
    in_specs = [hm_spec, hm_spec, hm_spec, row_spec, bias_spec,
                const_spec(ka), const_spec(wov3),
                const_spec(w1_t), const_spec(w2_t),
                const_spec(b1_2), const_spec(vecs)]

    # TODO(synk): emit bf16 output if the downstream consumer allows (halves
    # HBM writeback bytes); kept f32 here to match the reference check.
    out2 = pl.pallas_call(
        kernel,
        out_shape=jax.ShapeDtypeStruct((N * S, E), jnp.float32),
        grid_spec=pltpu.PrefetchScalarGridSpec(
            num_scalar_prefetch=0,
            grid=(N // tb,),
            in_specs=in_specs,
            out_specs=pl.BlockSpec((tb * S, E), lambda n: (n, 0))),
        compiler_params=pltpu.CompilerParams(
            dimension_semantics=("parallel",),
            vmem_limit_bytes=int(vmem_limit)),
    )(q_hm, k_hm, v_hm, q2, bias, ka, wov3, w1_t, w2_t, b1_2, vecs)

    return out2.reshape(N, S, E)


def reference(value, key, query, mask, params, heads):
    """Pure-JAX (f32) replica of the PyTorch forward (eval mode)."""
    N, S, E = query.shape
    D = E // heads
    wv, wk, wq, wo, bo, g1, be1, w1, b1, w2, b2, g2, be2 = params

    def split(x):
        return x.reshape(N, S, heads, D)

    vs = split(value) @ wv.T
    ks = split(key) @ wk.T
    qs = split(query) @ wq.T
    energy = jnp.einsum('nqhd,nkhd->nhqk', qs, ks)
    energy = jnp.where(mask[:, None, :, :] == 0, jnp.float32(-1e20), energy)
    attn = jax.nn.softmax(energy / jnp.sqrt(jnp.float32(E)), axis=-1)
    out = jnp.einsum('nhqk,nkhd->nqhd', attn, vs).reshape(N, S, E)
    attn_out = out @ wo.T + bo

    def ln(x, g, b):
        mu = x.mean(-1, keepdims=True)
        var = ((x - mu) ** 2).mean(-1, keepdims=True)
        return (x - mu) / jnp.sqrt(var + 1e-5) * g + b

    x = ln(attn_out + query, g1, be1)
    f = jnp.maximum(x @ w1.T + b1, 0.0) @ w2.T + b2
    return ln(f + x, g2, be2)


if __name__ == "__main__":
    N, S = 2, 8
    embed_size, heads, forward_expansion = 32, 4, 4
    D = embed_size // heads
    FE = forward_expansion * embed_size

    root = jax.random.PRNGKey(0)
    ks = jax.random.split(root, 12)

    value = jax.random.normal(ks[0], (N, S, embed_size), jnp.float32)
    key_t = jax.random.normal(ks[1], (N, S, embed_size), jnp.float32)
    query = jax.random.normal(ks[2], (N, S, embed_size), jnp.float32)
    # causal mask (lower triangular); 0 entries are masked with -1e20
    mask = jnp.tril(jnp.ones((S, S), jnp.int32))[None].repeat(N, axis=0)

    s = 0.05
    params = (
        s * jax.random.normal(ks[3], (D, D), jnp.float32),     # wv
        s * jax.random.normal(ks[4], (D, D), jnp.float32),     # wk
        s * jax.random.normal(ks[5], (D, D), jnp.float32),     # wq
        s * jax.random.normal(ks[6], (embed_size, embed_size), jnp.float32),  # wo
        s * jax.random.normal(ks[7], (embed_size,), jnp.float32),             # bo
        jnp.ones((embed_size,), jnp.float32),                   # norm1 gamma
        jnp.zeros((embed_size,), jnp.float32),                  # norm1 beta
        s * jax.random.normal(ks[8], (FE, embed_size), jnp.float32),          # w1
        s * jax.random.normal(ks[9], (FE,), jnp.float32),                     # b1
        s * jax.random.normal(ks[10], (embed_size, FE), jnp.float32),         # w2
        s * jax.random.normal(ks[11], (embed_size,), jnp.float32),            # b2
        jnp.ones((embed_size,), jnp.float32),                   # norm2 gamma
        jnp.zeros((embed_size,), jnp.float32),                  # norm2 beta
    )

    out = transformer_block(value, key_t, query, mask, params, heads=heads)
    out = jax.block_until_ready(out)

    ref = jax.block_until_ready(reference(value, key_t, query, mask, params, heads))
    assert out.shape == (N, S, embed_size)
    assert jnp.allclose(out, ref, rtol=2e-2, atol=2e-2), "mismatch vs reference"

    print("KERNEL_OK")
</pallas_src>

<mosaic_0001>
module attributes {stable_mosaic.version = 11 : i64} {
  func.func @transformer_block_kernel(%arg0: i32, %arg1: memref<4x1x8x8xbf16, #tpu.memory_space<vmem>>, %arg2: memref<4x1x8x8xbf16, #tpu.memory_space<vmem>>, %arg3: memref<4x1x8x8xbf16, #tpu.memory_space<vmem>>, %arg4: memref<8x32xf32, #tpu.memory_space<vmem>>, %arg5: memref<1x8x8xf32, #tpu.memory_space<vmem>>, %arg6: memref<8x8xbf16, #tpu.memory_space<vmem>>, %arg7: memref<4x8x32xbf16, #tpu.memory_space<vmem>>, %arg8: memref<32x128xbf16, #tpu.memory_space<vmem>>, %arg9: memref<128x32xbf16, #tpu.memory_space<vmem>>, %arg10: memref<1x128xf32, #tpu.memory_space<vmem>>, %arg11: memref<8x32xf32, #tpu.memory_space<vmem>>, %arg12: memref<8x32xf32, #tpu.memory_space<vmem>>) attributes {dimension_semantics = [#tpu.dimension_semantics<parallel>], iteration_bounds = array<i64: 2>, scalar_prefetch = 0 : i64, scratch_operands = 0 : i64, tpu.core_type = #tpu.core_type<tc>, window_params = [{transform_indices = @transform_0, window_bounds = array<i64: 4, 1, 8, 8>}, {transform_indices = @transform_1, window_bounds = array<i64: 4, 1, 8, 8>}, {transform_indices = @transform_2, window_bounds = array<i64: 4, 1, 8, 8>}, {transform_indices = @transform_3, window_bounds = array<i64: 8, 32>}, {transform_indices = @transform_4, window_bounds = array<i64: 1, 8, 8>}, {pipeline_mode = #tpu.pipeline_mode<synchronous>, transform_indices = @transform_5, window_bounds = array<i64: 8, 8>}, {pipeline_mode = #tpu.pipeline_mode<synchronous>, transform_indices = @transform_6, window_bounds = array<i64: 4, 8, 32>}, {pipeline_mode = #tpu.pipeline_mode<synchronous>, transform_indices = @transform_7, window_bounds = array<i64: 32, 128>}, {pipeline_mode = #tpu.pipeline_mode<synchronous>, transform_indices = @transform_8, window_bounds = array<i64: 128, 32>}, {pipeline_mode = #tpu.pipeline_mode<synchronous>, transform_indices = @transform_9, window_bounds = array<i64: 1, 128>}, {pipeline_mode = #tpu.pipeline_mode<synchronous>, transform_indices = @transform_10, window_bounds = array<i64: 8, 32>}, {transform_indices = @transform_11, window_bounds = array<i64: 8, 32>}]} {
    %c0 = arith.constant 0 : index
    %c0_0 = arith.constant 0 : index
    %c0_1 = arith.constant 0 : index
    %c0_2 = arith.constant 0 : index
    %0 = vector.load %arg1[%c0, %c0_0, %c0_1, %c0_2] : memref<4x1x8x8xbf16, #tpu.memory_space<vmem>>, vector<4x1x8x8xbf16>
    %1 = vector.shape_cast %0 : vector<4x1x8x8xbf16> to vector<4x8x8xbf16>
    %c0_3 = arith.constant 0 : index
    %c0_4 = arith.constant 0 : index
    %c0_5 = arith.constant 0 : index
    %c0_6 = arith.constant 0 : index
    %2 = vector.load %arg2[%c0_3, %c0_4, %c0_5, %c0_6] : memref<4x1x8x8xbf16, #tpu.memory_space<vmem>>, vector<4x1x8x8xbf16>
    %3 = vector.shape_cast %2 : vector<4x1x8x8xbf16> to vector<4x8x8xbf16>
    %c0_7 = arith.constant 0 : index
    %c0_8 = arith.constant 0 : index
    %c0_9 = arith.constant 0 : index
    %c0_10 = arith.constant 0 : index
    %4 = vector.load %arg3[%c0_7, %c0_8, %c0_9, %c0_10] : memref<4x1x8x8xbf16, #tpu.memory_space<vmem>>, vector<4x1x8x8xbf16>
    %5 = vector.shape_cast %4 : vector<4x1x8x8xbf16> to vector<4x8x8xbf16>
    %6 = vector.shape_cast %3 : vector<4x8x8xbf16> to vector<32x8xbf16>
    %c0_11 = arith.constant 0 : index
    %c0_12 = arith.constant 0 : index
    %7 = vector.load %arg6[%c0_11, %c0_12] : memref<8x8xbf16, #tpu.memory_space<vmem>>, vector<8x8xbf16>
    %cst = arith.constant dense<0.000000e+00> : vector<32x8xf32>
    %8 = tpu.matmul %6, %7, %cst {dimension_numbers = #tpu.dot_dimension_numbers<[1], [0], [0], [1], [0, 0, 1, 1], [], []>} : vector<32x8xbf16>, vector<8x8xbf16>, vector<32x8xf32> -> vector<32x8xf32>
    %9 = arith.truncf %8 : vector<32x8xf32> to vector<32x8xbf16>
    %10 = vector.shape_cast %9 : vector<32x8xbf16> to vector<4x8x8xbf16>
    "tpu.trace_start"() <{level = 10 : i32, message = "bqd,bkd->bqk"}> : () -> ()
    %cst_13 = arith.constant dense<0.000000e+00> : vector<4x8x8xf32>
    %11 = tpu.matmul %1, %10, %cst_13 {dimension_numbers = #tpu.dot_dimension_numbers<[2], [2], [1], [1], [0, 0, 0, 1, 1, 1], [0], [0]>} : vector<4x8x8xbf16>, vector<4x8x8xbf16>, vector<4x8x8xf32> -> vector<4x8x8xf32>
    "tpu.trace_stop"() : () -> ()
    %12 = vector.shape_cast %11 : vector<4x8x8xf32> to vector<4x1x8x8xf32>
    %c0_14 = arith.constant 0 : index
    %c0_15 = arith.constant 0 : index
    %c0_16 = arith.constant 0 : index
    %13 = vector.load %arg5[%c0_14, %c0_15, %c0_16] : memref<1x8x8xf32, #tpu.memory_space<vmem>>, vector<1x8x8xf32>
    %14 = vector.shape_cast %13 : vector<1x8x8xf32> to vector<1x1x8x8xf32>
    %15 = vector.broadcast %14 : vector<1x1x8x8xf32> to vector<4x1x8x8xf32>
    %16 = arith.addf %12, %15 : vector<4x1x8x8xf32>
    %cst_17 = arith.constant dense<0xFF800000> : vector<4x1x8xf32>
    %17 = vector.multi_reduction <maximumf>, %16, %cst_17 [3] : vector<4x1x8x8xf32> to vector<4x1x8xf32>
    %18 = vector.shape_cast %17 : vector<4x1x8xf32> to vector<4x1x8x1xf32>
    %19 = vector.broadcast %18 : vector<4x1x8x1xf32> to vector<4x1x8x8xf32>
    %20 = arith.subf %16, %19 : vector<4x1x8x8xf32>
    %21 = math.exp %20 : vector<4x1x8x8xf32>
    %cst_18 = arith.constant dense<0.000000e+00> : vector<4x1x8xf32>
    %22 = vector.multi_reduction <add>, %21, %cst_18 [3] : vector<4x1x8x8xf32> to vector<4x1x8xf32>
    %23 = vector.shape_cast %22 : vector<4x1x8xf32> to vector<4x1x8x1xf32>
    %24 = tpu.reciprocal %23 {approx = true} : vector<4x1x8x1xf32> -> vector<4x1x8x1xf32>
    %25 = vector.broadcast %24 : vector<4x1x8x1xf32> to vector<4x1x8x8xf32>
    %26 = arith.mulf %21, %25 : vector<4x1x8x8xf32>
    %27 = arith.truncf %26 : vector<4x1x8x8xf32> to vector<4x1x8x8xbf16>
    %28 = vector.shape_cast %27 : vector<4x1x8x8xbf16> to vector<4x8x8xbf16>
    "tpu.trace_start"() <{level = 10 : i32, message = "bqk,bkd->bqd"}> : () -> ()
    %cst_19 = arith.constant dense<0.000000e+00> : vector<4x8x8xf32>
    %29 = tpu.matmul %28, %5, %cst_19 {dimension_numbers = #tpu.dot_dimension_numbers<[2], [1], [1], [2], [0, 0, 0, 1, 1, 2], [0], [0]>} : vector<4x8x8xbf16>, vector<4x8x8xbf16>, vector<4x8x8xf32> -> vector<4x8x8xf32>
    "tpu.trace_stop"() : () -> ()
    %30 = arith.truncf %29 : vector<4x8x8xf32> to vector<4x8x8xbf16>
    %31 = vector.extract_strided_slice %30 {offsets = [0, 0, 0], sizes = [1, 8, 8], strides = [1, 1, 1]} : vector<4x8x8xbf16> to vector<1x8x8xbf16>
    %32 = vector.shape_cast %31 : vector<1x8x8xbf16> to vector<8x8xbf16>
    %c0_20 = arith.constant 0 : index
    %c0_21 = arith.constant 0 : index
    %c0_22 = arith.constant 0 : index
    %33 = vector.load %arg7[%c0_20, %c0_21, %c0_22] : memref<4x8x32xbf16, #tpu.memory_space<vmem>>, vector<1x8x32xbf16>
    %34 = vector.shape_cast %33 : vector<1x8x32xbf16> to vector<8x32xbf16>
    %cst_23 = arith.constant dense<0.000000e+00> : vector<8x32xf32>
    %35 = tpu.matmul %32, %34, %cst_23 {dimension_numbers = #tpu.dot_dimension_numbers<[1], [0], [0], [1], [0, 0, 1, 1], [], []>} : vector<8x8xbf16>, vector<8x32xbf16>, vector<8x32xf32> -> vector<8x32xf32>
    %36 = vector.extract_strided_slice %30 {offsets = [1, 0, 0], sizes = [1, 8, 8], strides = [1, 1, 1]} : vector<4x8x8xbf16> to vector<1x8x8xbf16>
    %37 = vector.shape_cast %36 : vector<1x8x8xbf16> to vector<8x8xbf16>
    %c1 = arith.constant 1 : index
    %c0_24 = arith.constant 0 : index
    %c0_25 = arith.constant 0 : index
    %38 = vector.load %arg7[%c1, %c0_24, %c0_25] : memref<4x8x32xbf16, #tpu.memory_space<vmem>>, vector<1x8x32xbf16>
    %39 = vector.shape_cast %38 : vector<1x8x32xbf16> to vector<8x32xbf16>
    %cst_26 = arith.constant dense<0.000000e+00> : vector<8x32xf32>
    %40 = tpu.matmul %37, %39, %cst_26 {dimension_numbers = #tpu.dot_dimension_numbers<[1], [0], [0], [1], [0, 0, 1, 1], [], []>} : vector<8x8xbf16>, vector<8x32xbf16>, vector<8x32xf32> -> vector<8x32xf32>
    %41 = arith.addf %35, %40 : vector<8x32xf32>
    %42 = vector.extract_strided_slice %30 {offsets = [2, 0, 0], sizes = [1, 8, 8], strides = [1, 1, 1]} : vector<4x8x8xbf16> to vector<1x8x8xbf16>
    %43 = vector.shape_cast %42 : vector<1x8x8xbf16> to vector<8x8xbf16>
    %c2 = arith.constant 2 : index
    %c0_27 = arith.constant 0 : index
    %c0_28 = arith.constant 0 : index
    %44 = vector.load %arg7[%c2, %c0_27, %c0_28] : memref<4x8x32xbf16, #tpu.memory_space<vmem>>, vector<1x8x32xbf16>
    %45 = vector.shape_cast %44 : vector<1x8x32xbf16> to vector<8x32xbf16>
    %cst_29 = arith.constant dense<0.000000e+00> : vector<8x32xf32>
    %46 = tpu.matmul %43, %45, %cst_29 {dimension_numbers = #tpu.dot_dimension_numbers<[1], [0], [0], [1], [0, 0, 1, 1], [], []>} : vector<8x8xbf16>, vector<8x32xbf16>, vector<8x32xf32> -> vector<8x32xf32>
    %47 = arith.addf %41, %46 : vector<8x32xf32>
    %48 = vector.extract_strided_slice %30 {offsets = [3, 0, 0], sizes = [1, 8, 8], strides = [1, 1, 1]} : vector<4x8x8xbf16> to vector<1x8x8xbf16>
    %49 = vector.shape_cast %48 : vector<1x8x8xbf16> to vector<8x8xbf16>
    %c3 = arith.constant 3 : index
    %c0_30 = arith.constant 0 : index
    %c0_31 = arith.constant 0 : index
    %50 = vector.load %arg7[%c3, %c0_30, %c0_31] : memref<4x8x32xbf16, #tpu.memory_space<vmem>>, vector<1x8x32xbf16>
    %51 = vector.shape_cast %50 : vector<1x8x32xbf16> to vector<8x32xbf16>
    %cst_32 = arith.constant dense<0.000000e+00> : vector<8x32xf32>
    %52 = tpu.matmul %49, %51, %cst_32 {dimension_numbers = #tpu.dot_dimension_numbers<[1], [0], [0], [1], [0, 0, 1, 1], [], []>} : vector<8x8xbf16>, vector<8x32xbf16>, vector<8x32xf32> -> vector<8x32xf32>
    %53 = arith.addf %47, %52 : vector<8x32xf32>
    %c0_33 = arith.constant 0 : index
    %c0_34 = arith.constant 0 : index
    %54 = vector.load %arg11[%c0_33, %c0_34] : memref<8x32xf32, #tpu.memory_space<vmem>>, vector<1x32xf32>
    %55 = vector.broadcast %54 : vector<1x32xf32> to vector<8x32xf32>
    %56 = arith.addf %53, %55 : vector<8x32xf32>
    %c0_35 = arith.constant 0 : index
    %c0_36 = arith.constant 0 : index
    %57 = vector.load %arg4[%c0_35, %c0_36] : memref<8x32xf32, #tpu.memory_space<vmem>>, vector<8x32xf32>
    %58 = arith.addf %56, %57 : vector<8x32xf32>
    %c1_37 = arith.constant 1 : index
    %c0_38 = arith.constant 0 : index
    %59 = vector.load %arg11[%c1_37, %c0_38] : memref<8x32xf32, #tpu.memory_space<vmem>>, vector<1x32xf32>
    %c2_39 = arith.constant 2 : index
    %c0_40 = arith.constant 0 : index
    %60 = vector.load %arg11[%c2_39, %c0_40] : memref<8x32xf32, #tpu.memory_space<vmem>>, vector<1x32xf32>
    %cst_41 = arith.constant dense<0.000000e+00> : vector<8xf32>
    %61 = vector.multi_reduction <add>, %58, %cst_41 [1] : vector<8x32xf32> to vector<8xf32>
    %62 = vector.shape_cast %61 : vector<8xf32> to vector<8x1xf32>
    %cst_42 = arith.constant 3.200000e+01 : f32
    %63 = vector.broadcast %cst_42 : f32 to vector<8x1xf32>
    %64 = arith.divf %62, %63 : vector<8x1xf32>
    %65 = vector.broadcast %64 : vector<8x1xf32> to vector<8x32xf32>
    %66 = arith.subf %58, %65 : vector<8x32xf32>
    %67 = arith.mulf %66, %66 : vector<8x32xf32>
    %cst_43 = arith.constant dense<0.000000e+00> : vector<8xf32>
    %68 = vector.multi_reduction <add>, %67, %cst_43 [1] : vector<8x32xf32> to vector<8xf32>
    %69 = vector.shape_cast %68 : vector<8xf32> to vector<8x1xf32>
    %cst_44 = arith.constant 3.200000e+01 : f32
    %70 = vector.broadcast %cst_44 : f32 to vector<8x1xf32>
    %71 = arith.divf %69, %70 : vector<8x1xf32>
    %cst_45 = arith.constant 9.99999974E-6 : f32
    %72 = vector.broadcast %cst_45 : f32 to vector<8x1xf32>
    %73 = arith.addf %71, %72 : vector<8x1xf32>
    %74 = math.rsqrt %73 : vector<8x1xf32>
    %75 = vector.broadcast %74 : vector<8x1xf32> to vector<8x32xf32>
    %76 = arith.mulf %66, %75 : vector<8x32xf32>
    %77 = vector.broadcast %59 : vector<1x32xf32> to vector<8x32xf32>
    %78 = arith.mulf %76, %77 : vector<8x32xf32>
    %79 = vector.broadcast %60 : vector<1x32xf32> to vector<8x32xf32>
    %80 = arith.addf %78, %79 : vector<8x32xf32>
    %81 = arith.truncf %80 : vector<8x32xf32> to vector<8x32xbf16>
    %c0_46 = arith.constant 0 : index
    %c0_47 = arith.constant 0 : index
    %82 = vector.load %arg8[%c0_46, %c0_47] : memref<32x128xbf16, #tpu.memory_space<vmem>>, vector<32x128xbf16>
    %cst_48 = arith.constant dense<0.000000e+00> : vector<8x128xf32>
    %83 = tpu.matmul %81, %82, %cst_48 {dimension_numbers = #tpu.dot_dimension_numbers<[1], [0], [0], [1], [0, 0, 1, 1], [], []>} : vector<8x32xbf16>, vector<32x128xbf16>, vector<8x128xf32> -> vector<8x128xf32>
    %c0_49 = arith.constant 0 : index
    %c0_50 = arith.constant 0 : index
    %84 = vector.load %arg10[%c0_49, %c0_50] : memref<1x128xf32, #tpu.memory_space<vmem>>, vector<1x128xf32>
    %85 = vector.broadcast %84 : vector<1x128xf32> to vector<8x128xf32>
    %86 = arith.addf %83, %85 : vector<8x128xf32>
    %cst_51 = arith.constant 0.000000e+00 : f32
    %87 = vector.broadcast %cst_51 : f32 to vector<8x128xf32>
    %88 = arith.maximumf %86, %87 : vector<8x128xf32>
    %89 = arith.truncf %88 : vector<8x128xf32> to vector<8x128xbf16>
    %c0_52 = arith.constant 0 : index
    %c0_53 = arith.constant 0 : index
    %90 = vector.load %arg9[%c0_52, %c0_53] : memref<128x32xbf16, #tpu.memory_space<vmem>>, vector<128x32xbf16>
    %cst_54 = arith.constant dense<0.000000e+00> : vector<8x32xf32>
    %91 = tpu.matmul %89, %90, %cst_54 {dimension_numbers = #tpu.dot_dimension_numbers<[1], [0], [0], [1], [0, 0, 1, 1], [], []>} : vector<8x128xbf16>, vector<128x32xbf16>, vector<8x32xf32> -> vector<8x32xf32>
    %c3_55 = arith.constant 3 : index
    %c0_56 = arith.constant 0 : index
    %92 = vector.load %arg11[%c3_55, %c0_56] : memref<8x32xf32, #tpu.memory_space<vmem>>, vector<1x32xf32>
    %93 = vector.broadcast %92 : vector<1x32xf32> to vector<8x32xf32>
    %94 = arith.addf %91, %93 : vector<8x32xf32>
    %95 = arith.addf %94, %80 : vector<8x32xf32>
    %c4 = arith.constant 4 : index
    %c0_57 = arith.constant 0 : index
    %96 = vector.load %arg11[%c4, %c0_57] : memref<8x32xf32, #tpu.memory_space<vmem>>, vector<1x32xf32>
    %c5 = arith.constant 5 : index
    %c0_58 = arith.constant 0 : index
    %97 = vector.load %arg11[%c5, %c0_58] : memref<8x32xf32, #tpu.memory_space<vmem>>, vector<1x32xf32>
    %cst_59 = arith.constant dense<0.000000e+00> : vector<8xf32>
    %98 = vector.multi_reduction <add>, %95, %cst_59 [1] : vector<8x32xf32> to vector<8xf32>
    %99 = vector.shape_cast %98 : vector<8xf32> to vector<8x1xf32>
    %cst_60 = arith.constant 3.200000e+01 : f32
    %100 = vector.broadcast %cst_60 : f32 to vector<8x1xf32>
    %101 = arith.divf %99, %100 : vector<8x1xf32>
    %102 = vector.broadcast %101 : vector<8x1xf32> to vector<8x32xf32>
    %103 = arith.subf %95, %102 : vector<8x32xf32>
    %104 = arith.mulf %103, %103 : vector<8x32xf32>
    %cst_61 = arith.constant dense<0.000000e+00> : vector<8xf32>
    %105 = vector.multi_reduction <add>, %104, %cst_61 [1] : vector<8x32xf32> to vector<8xf32>
    %106 = vector.shape_cast %105 : vector<8xf32> to vector<8x1xf32>
    %cst_62 = arith.constant 3.200000e+01 : f32
    %107 = vector.broadcast %cst_62 : f32 to vector<8x1xf32>
    %108 = arith.divf %106, %107 : vector<8x1xf32>
    %cst_63 = arith.constant 9.99999974E-6 : f32
    %109 = vector.broadcast %cst_63 : f32 to vector<8x1xf32>
    %110 = arith.addf %108, %109 : vector<8x1xf32>
    %111 = math.rsqrt %110 : vector<8x1xf32>
    %112 = vector.broadcast %111 : vector<8x1xf32> to vector<8x32xf32>
    %113 = arith.mulf %103, %112 : vector<8x32xf32>
    %114 = vector.broadcast %96 : vector<1x32xf32> to vector<8x32xf32>
    %115 = arith.mulf %113, %114 : vector<8x32xf32>
    %116 = vector.broadcast %97 : vector<1x32xf32> to vector<8x32xf32>
    %117 = arith.addf %115, %116 : vector<8x32xf32>
    %c0_64 = arith.constant 0 : index
    %c0_65 = arith.constant 0 : index
    %118 = vector.load %arg12[%c0_64, %c0_65] : memref<8x32xf32, #tpu.memory_space<vmem>>, vector<8x32xf32>
    tpu.vector_store %arg12[%c0_64, %c0_65], %117 {strides = array<i32>} : memref<8x32xf32, #tpu.memory_space<vmem>>, vector<8x32xf32>,
    return
  }
  func.func @transform_0(%arg0: i32) -> (i32, i32, i32, i32) {
    %c0_i32 = arith.constant 0 : i32
    %c0_i32_0 = arith.constant 0 : i32
    %c0_i32_1 = arith.constant 0 : i32
    %c0_i32_2 = arith.constant 0 : i32
    return %c0_i32, %arg0, %c0_i32_0, %c0_i32_1 : i32, i32, i32, i32
  }
  func.func @transform_1(%arg0: i32) -> (i32, i32, i32, i32) {
    %c0_i32 = arith.constant 0 : i32
    %c0_i32_0 = arith.constant 0 : i32
    %c0_i32_1 = arith.constant 0 : i32
    %c0_i32_2 = arith.constant 0 : i32
    return %c0_i32, %arg0, %c0_i32_0, %c0_i32_1 : i32, i32, i32, i32
  }
  func.func @transform_2(%arg0: i32) -> (i32, i32, i32, i32) {
    %c0_i32 = arith.constant 0 : i32
    %c0_i32_0 = arith.constant 0 : i32
    %c0_i32_1 = arith.constant 0 : i32
    %c0_i32_2 = arith.constant 0 : i32
    return %c0_i32, %arg0, %c0_i32_0, %c0_i32_1 : i32, i32, i32, i32
  }
  func.func @transform_3(%arg0: i32) -> (i32, i32) {
    %c0_i32 = arith.constant 0 : i32
    %c0_i32_0 = arith.constant 0 : i32
    return %arg0, %c0_i32 : i32, i32
  }
  func.func @transform_4(%arg0: i32) -> (i32, i32, i32) {
    %c0_i32 = arith.constant 0 : i32
    %c0_i32_0 = arith.constant 0 : i32
    %c0_i32_1 = arith.constant 0 : i32
    return %arg0, %c0_i32, %c0_i32_0 : i32, i32, i32
  }
  func.func @transform_5(%arg0: i32) -> (i32, i32) {
    %c0_i32 = arith.constant 0 : i32
    %c0_i32_0 = arith.constant 0 : i32
    %c0_i32_1 = arith.constant 0 : i32
    return %c0_i32, %c0_i32_0 : i32, i32
  }
  func.func @transform_6(%arg0: i32) -> (i32, i32, i32) {
    %c0_i32 = arith.constant 0 : i32
    %c0_i32_0 = arith.constant 0 : i32
    %c0_i32_1 = arith.constant 0 : i32
    %c0_i32_2 = arith.constant 0 : i32
    return %c0_i32, %c0_i32_0, %c0_i32_1 : i32, i32, i32
  }
  func.func @transform_7(%arg0: i32) -> (i32, i32) {
    %c0_i32 = arith.constant 0 : i32
    %c0_i32_0 = arith.constant 0 : i32
    %c0_i32_1 = arith.constant 0 : i32
    return %c0_i32, %c0_i32_0 : i32, i32
  }
  func.func @transform_8(%arg0: i32) -> (i32, i32) {
    %c0_i32 = arith.constant 0 : i32
    %c0_i32_0 = arith.constant 0 : i32
    %c0_i32_1 = arith.constant 0 : i32
    return %c0_i32, %c0_i32_0 : i32, i32
  }
  func.func @transform_9(%arg0: i32) -> (i32, i32) {
    %c0_i32 = arith.constant 0 : i32
    %c0_i32_0 = arith.constant 0 : i32
    %c0_i32_1 = arith.constant 0 : i32
    return %c0_i32, %c0_i32_0 : i32, i32
  }
  func.func @transform_10(%arg0: i32) -> (i32, i32) {
    %c0_i32 = arith.constant 0 : i32
    %c0_i32_0 = arith.constant 0 : i32
    %c0_i32_1 = arith.constant 0 : i32
    return %c0_i32, %c0_i32_0 : i32, i32
  }
  func.func @transform_11(%arg0: i32) -> (i32, i32) {
    %c0_i32 = arith.constant 0 : i32
    %c0_i32_0 = arith.constant 0 : i32
    return %arg0, %c0_i32 : i32, i32
  }
}

</mosaic_0001>

<llo_original>
// kernel: tpu_custom_call.1
$region0: #{tpu_custom_call.1}
  #allocation0 [shape = 'u32[]', space=smem, size = 0x4, offset = 0x4, fixed_abs, tag = 'smem constant byte address 0x4 - core index']
  #allocation1 [shape = 'u32[72,128]{1,0:T(1,128)}', space=vmem, size = 0x9000, scoped, tag = 'internal scratch']
  %s0 = inlined_call_operand.vmem [shape: bf16[4,2,8,8], index: 0, kind: input, shape index: {}]
  %s1 = inlined_call_operand.vmem [shape: bf16[4,2,8,8], index: 1, kind: input, shape index: {}]
  %s2 = inlined_call_operand.hbm [shape: bf16[4,2,8,8], index: 2, kind: input, shape index: {}]
  %s3 = inlined_call_operand.vmem [shape: f32[16,32], index: 3, kind: input, shape index: {}]
  %s4 = inlined_call_operand.hbm [shape: f32[2,8,8], index: 4, kind: input, shape index: {}]
  %s5 = inlined_call_operand.hbm [shape: bf16[8,8], index: 5, kind: input, shape index: {}]
  %s6 = inlined_call_operand.hbm [shape: bf16[4,8,32], index: 6, kind: input, shape index: {}]
  %s7 = inlined_call_operand.hbm [shape: bf16[32,128], index: 7, kind: input, shape index: {}]
  %s8 = inlined_call_operand.vmem [shape: bf16[128,32], index: 8, kind: input, shape index: {}]
  %s9 = inlined_call_operand.hbm [shape: f32[1,128], index: 9, kind: input, shape index: {}]
  %s10 = inlined_call_operand.vmem [shape: f32[8,32], index: 10, kind: input, shape index: {}]
  %s11 = inlined_call_operand.hbm [shape: f32[16,32], index: 11, kind: output, shape index: {}]
  %s12 = sld [smem:[#allocation0]]
  $region183: #{tpu_custom_call.1} parent=0
    _
  %s14 = ssub.s32 1, %s12
  %s15 = scalar_select 0, %s14, %s12
  $region1: #{tpu_custom_call.1} parent=0
    #allocation2 [shape = 'u8[16384]{0}', space=vmem, size = 0x4000, scoped, tag = 'input window, operand 0']
    #allocation3 [shape = 'u8[16384]{0}', space=vmem, size = 0x4000, scoped, tag = 'input window, operand 1']
    #allocation4 [shape = 'u8[16384]{0}', space=vmem, size = 0x4000, scoped, tag = 'input window, operand 2']
    #allocation5 [shape = 's32[2]{0}', space=sflag, size = 0x8, scoped, tag = 'scoped memory for tpu_custom_call.1']
    #allocation6 [shape = 's32[2]{0}', space=sflag, size = 0x8, scoped, tag = 'scoped memory for tpu_custom_call.1']
    #allocation7 [shape = 'u8[8192]{0}', space=vmem, size = 0x2000, scoped, tag = 'input window, operand 4']
    #allocation8 [shape = 's32[2]{0}', space=sflag, size = 0x8, scoped, tag = 'scoped memory for tpu_custom_call.1']
    #allocation9 [shape = 'u8[2048]{0}', space=vmem, size = 0x800, scoped, tag = 'input window, operand 5, single buffered']
    #allocation10 [shape = 'u8[8192]{0}', space=vmem, size = 0x2000, scoped, tag = 'input window, operand 6, single buffered']
    #allocation11 [shape = 's32[1]{0}', space=sflag, size = 0x4, scoped, tag = 'scoped memory for tpu_custom_call.1']
    #allocation12 [shape = 'u8[8192]{0}', space=vmem, size = 0x2000, scoped, tag = 'input window, operand 7, single buffered']
    #allocation13 [shape = 'u8[512]{0}', space=vmem, size = 0x400, scoped, tag = 'input window, operand 9, single buffered']
    #allocation14 [shape = 's32[1]{0}', space=sflag, size = 0x4, scoped, tag = 'scoped memory for tpu_custom_call.1']
    #allocation15 [shape = 'u8[8192]{0}', space=vmem, size = 0x2000, scoped, tag = 'output window, operand 0']
    %16 = vsyncpa [#allocation5], 0
    %s17 = scalar_lea.sflag [#allocation5], 1
    %18 = vsyncpa %s17, 0
    %19 = vsyncpa [#allocation8], 0
    %s20 = scalar_lea.sflag [#allocation8], 1
    %21 = vsyncpa %s20, 0
    %22 = vsyncpa [#allocation11], 0
    %23 = vsyncpa [#allocation14], 0
    %24 = vsyncpa [#allocation6], 0
    %s25 = scalar_lea.sflag [#allocation6], 1
    %26 = vsyncpa %s25, 0
    loop: start=0, step=1, limit=4
    $region2: #{tpu_custom_call.1} parent=1 // loop_pre_header
      _
    $region3: #{tpu_custom_call.1} parent=1 // loop_header
      %s28 = sphi 0, %s32
      %p29 = scmp.ge.s32.totalorder %s28, 4
      %s38 = sphi 0, %s40
      %s41 = sphi 0, %s38
      %s42 = sphi 0, %s41
      %s58 = sphi 0, %s42
      %s64 = sphi 0, %s66
      %s67 = sphi 0, %s64
      %s68 = sphi 0, %s67
      %s84 = sphi 0, %s68
      %s90 = sphi 0, %s92
      %s93 = sphi 0, %s90
      %s94 = sphi 0, %s93
      %s110 = sphi 0, %s94
      %s116 = sphi 0, %s118
      %s119 = sphi 0, %s116
      %s120 = sphi 0, %s119
      %s136 = sphi 0, %s120
      %s142 = sphi 0, %s144
      %s145 = sphi 0, %s142
      %s146 = sphi 0, %s145
      %s162 = sphi 0, %s146
      %s166 = sphi 0, %s166
      %s168 = sphi 0, %s166
      %s169 = sphi 0, %s168
      %s183 = sphi 0, %s169
      %s187 = sphi 0, %s187
      %s189 = sphi 0, %s187
      %s190 = sphi 0, %s189
      %s204 = sphi 0, %s190
      %s208 = sphi 0, %s208
      %s210 = sphi 0, %s208
      %s211 = sphi 0, %s210
      %s225 = sphi 0, %s211
      %s229 = sphi 0, %s229
      %s231 = sphi 0, %s229
      %s232 = sphi 0, %s231
      %s246 = sphi 0, %s232
      %s250 = sphi 0, %s250
      %s252 = sphi 0, %s250
      %s253 = sphi 0, %s252
      %s267 = sphi 0, %s253
      %s271 = sphi 0, %s271
      %s273 = sphi 0, %s271
      %s274 = sphi 0, %s273
      %s288 = sphi 0, %s274
      %s294 = sphi 0, %s296
      %s297 = sphi 0, %s294
      %s298 = sphi 0, %s297
      %s314 = sphi 0, %s298
    $region4: #{tpu_custom_call.1} parent=1 // loop_header_branch
      %31 = sbr.rel (%p29) target = $region8
    $region5: #{tpu_custom_call.1} parent=1 // loop_body
      %s33 = ssub.s32 %s28, 1
      %s34 = ssub.s32 %s28, 2
      %s35 = sadd.s32 %s28, 1
      %s36 = ssub.s32 %s28, %s35
      %p37 = scmp.eq.s32.totalorder %s36, 0
      %s39 = sadd.s32 %s38, 1
      %s40 = scalar_select %p37, %s38, %s39
      %p43 = pneg %p37
      %p44 = scmp.eq.s32.totalorder %s28, 1
      %p45 = por %p43, %p44
      %p46 = scmp.ne.s32.totalorder %s38, %s41
      %p47 = scmp.eq.s32.totalorder %s28, 0
      %p48 = por %p46, %p47
      %p49 = scmp.ne.s32.totalorder %s38, %s41
      %p50 = scmp.eq.s32.totalorder %s33, 1
      %p51 = por %p49, %p50
      %p52 = scmp.ne.s32.totalorder %s41, %s42
      %p53 = scmp.eq.s32.totalorder %s33, 0
      %p54 = por %p52, %p53
      %p55 = scmp.ne.s32.totalorder %s41, %s42
      %p56 = scmp.eq.s32.totalorder %s34, 1
      %p57 = por %p55, %p56
      %p59 = scmp.ne.s32.totalorder %s42, %s58
      %p60 = scmp.eq.s32.totalorder %s34, 0
      %p61 = por %p59, %p60
      %s62 = ssub.s32 %s28, %s35
      %p63 = scmp.eq.s32.totalorder %s62, 0
      %s65 = sadd.s32 %s64, 1
      %s66 = scalar_select %p63, %s64, %s65
      %p69 = pneg %p63
      %p70 = scmp.eq.s32.totalorder %s28, 1
      %p71 = por %p69, %p70
      %p72 = scmp.ne.s32.totalorder %s64, %s67
      %p73 = scmp.eq.s32.totalorder %s28, 0
      %p74 = por %p72, %p73
      %p75 = scmp.ne.s32.totalorder %s64, %s67
      %p76 = scmp.eq.s32.totalorder %s33, 1
      %p77 = por %p75, %p76
      %p78 = scmp.ne.s32.totalorder %s67, %s68
      %p79 = scmp.eq.s32.totalorder %s33, 0
      %p80 = por %p78, %p79
      %p81 = scmp.ne.s32.totalorder %s67, %s68
      %p82 = scmp.eq.s32.totalorder %s34, 1
      %p83 = por %p81, %p82
      %p85 = scmp.ne.s32.totalorder %s68, %s84
      %p86 = scmp.eq.s32.totalorder %s34, 0
      %p87 = por %p85, %p86
      %s88 = ssub.s32 %s28, %s35
      %p89 = scmp.eq.s32.totalorder %s88, 0
      %s91 = sadd.s32 %s90, 1
      %s92 = scalar_select %p89, %s90, %s91
      %p95 = pneg %p89
      %p96 = scmp.eq.s32.totalorder %s28, 1
      %p97 = por %p95, %p96
      %p98 = scmp.ne.s32.totalorder %s90, %s93
      %p99 = scmp.eq.s32.totalorder %s28, 0
      %p100 = por %p98, %p99
      %p101 = scmp.ne.s32.totalorder %s90, %s93
      %p102 = scmp.eq.s32.totalorder %s33, 1
      %p103 = por %p101, %p102
      %p104 = scmp.ne.s32.totalorder %s93, %s94
      %p105 = scmp.eq.s32.totalorder %s33, 0
      %p106 = por %p104, %p105
      %p107 = scmp.ne.s32.totalorder %s93, %s94
      %p108 = scmp.eq.s32.totalorder %s34, 1
      %p109 = por %p107, %p108
      %p111 = scmp.ne.s32.totalorder %s94, %s110
      %p112 = scmp.eq.s32.totalorder %s34, 0
      %p113 = por %p111, %p112
      %s114 = ssub.s32 %s28, %s35
      %p115 = scmp.eq.s32.totalorder %s114, 0
      %s117 = sadd.s32 %s116, 1
      %s118 = scalar_select %p115, %s116, %s117
      %p121 = pneg %p115
      %p122 = scmp.eq.s32.totalorder %s28, 1
      %p123 = por %p121, %p122
      %p124 = scmp.ne.s32.totalorder %s116, %s119
      %p125 = scmp.eq.s32.totalorder %s28, 0
      %p126 = por %p124, %p125
      %p127 = scmp.ne.s32.totalorder %s116, %s119
      %p128 = scmp.eq.s32.totalorder %s33, 1
      %p129 = por %p127, %p128
      %p130 = scmp.ne.s32.totalorder %s119, %s120
      %p131 = scmp.eq.s32.totalorder %s33, 0
      %p132 = por %p130, %p131
      %p133 = scmp.ne.s32.totalorder %s119, %s120
      %p134 = scmp.eq.s32.totalorder %s34, 1
      %p135 = por %p133, %p134
      %p137 = scmp.ne.s32.totalorder %s120, %s136
      %p138 = scmp.eq.s32.totalorder %s34, 0
      %p139 = por %p137, %p138
      %s140 = ssub.s32 %s28, %s35
      %p141 = scmp.eq.s32.totalorder %s140, 0
      %s143 = sadd.s32 %s142, 1
      %s144 = scalar_select %p141, %s142, %s143
      %p147 = pneg %p141
      %p148 = scmp.eq.s32.totalorder %s28, 1
      %p149 = por %p147, %p148
      %p150 = scmp.ne.s32.totalorder %s142, %s145
      %p151 = scmp.eq.s32.totalorder %s28, 0
      %p152 = por %p150, %p151
      %p153 = scmp.ne.s32.totalorder %s142, %s145
      %p154 = scmp.eq.s32.totalorder %s33, 1
      %p155 = por %p153, %p154
      %p156 = scmp.ne.s32.totalorder %s145, %s146
      %p157 = scmp.eq.s32.totalorder %s33, 0
      %p158 = por %p156, %p157
      %p159 = scmp.ne.s32.totalorder %s145, %s146
      %p160 = scmp.eq.s32.totalorder %s34, 1
      %p161 = por %p159, %p160
      %p163 = scmp.ne.s32.totalorder %s146, %s162
      %p164 = scmp.eq.s32.totalorder %s34, 0
      %p165 = por %p163, %p164
      %s167 = sadd.s32 %s166, 1
      %p170 = scmp.eq.s32.totalorder %s28, 1
      %p171 = scmp.ne.s32.totalorder %s166, %s168
      %p172 = scmp.eq.s32.totalorder %s28, 0
      %p173 = por %p171, %p172
      %p174 = scmp.ne.s32.totalorder %s166, %s168
      %p175 = scmp.eq.s32.totalorder %s33, 1
      %p176 = por %p174, %p175
      %p177 = scmp.ne.s32.totalorder %s168, %s169
      %p178 = scmp.eq.s32.totalorder %s33, 0
      %p179 = por %p177, %p178
      %p180 = scmp.ne.s32.totalorder %s168, %s169
      %p181 = scmp.eq.s32.totalorder %s34, 1
      %p182 = por %p180, %p181
      %p184 = scmp.ne.s32.totalorder %s169, %s183
      %p185 = scmp.eq.s32.totalorder %s34, 0
      %p186 = por %p184, %p185
      %s188 = sadd.s32 %s187, 1
      %p191 = scmp.eq.s32.totalorder %s28, 1
      %p192 = scmp.ne.s32.totalorder %s187, %s189
      %p193 = scmp.eq.s32.totalorder %s28, 0
      %p194 = por %p192, %p193
      %p195 = scmp.ne.s32.totalorder %s187, %s189
      %p196 = scmp.eq.s32.totalorder %s33, 1
      %p197 = por %p195, %p196
      %p198 = scmp.ne.s32.totalorder %s189, %s190
      %p199 = scmp.eq.s32.totalorder %s33, 0
      %p200 = por %p198, %p199
      %p201 = scmp.ne.s32.totalorder %s189, %s190
      %p202 = scmp.eq.s32.totalorder %s34, 1
      %p203 = por %p201, %p202
      %p205 = scmp.ne.s32.totalorder %s190, %s204
      %p206 = scmp.eq.s32.totalorder %s34, 0
      %p207 = por %p205, %p206
      %s209 = sadd.s32 %s208, 1
      %p212 = scmp.eq.s32.totalorder %s28, 1
      %p213 = scmp.ne.s32.totalorder %s208, %s210
      %p214 = scmp.eq.s32.totalorder %s28, 0
      %p215 = por %p213, %p214
      %p216 = scmp.ne.s32.totalorder %s208, %s210
      %p217 = scmp.eq.s32.totalorder %s33, 1
      %p218 = por %p216, %p217
      %p219 = scmp.ne.s32.totalorder %s210, %s211
      %p220 = scmp.eq.s32.totalorder %s33, 0
      %p221 = por %p219, %p220
      %p222 = scmp.ne.s32.totalorder %s210, %s211
      %p223 = scmp.eq.s32.totalorder %s34, 1
      %p224 = por %p222, %p223
      %p226 = scmp.ne.s32.totalorder %s211, %s225
      %p227 = scmp.eq.s32.totalorder %s34, 0
      %p228 = por %p226, %p227
      %s230 = sadd.s32 %s229, 1
      %p233 = scmp.eq.s32.totalorder %s28, 1
      %p234 = scmp.ne.s32.totalorder %s229, %s231
      %p235 = scmp.eq.s32.totalorder %s28, 0
      %p236 = por %p234, %p235
      %p237 = scmp.ne.s32.totalorder %s229, %s231
      %p238 = scmp.eq.s32.totalorder %s33, 1
      %p239 = por %p237, %p238
      %p240 = scmp.ne.s32.totalorder %s231, %s232
      %p241 = scmp.eq.s32.totalorder %s33, 0
      %p242 = por %p240, %p241
      %p243 = scmp.ne.s32.totalorder %s231, %s232
      %p244 = scmp.eq.s32.totalorder %s34, 1
      %p245 = por %p243, %p244
      %p247 = scmp.ne.s32.totalorder %s232, %s246
      %p248 = scmp.eq.s32.totalorder %s34, 0
      %p249 = por %p247, %p248
      %s251 = sadd.s32 %s250, 1
      %p254 = scmp.eq.s32.totalorder %s28, 1
      %p255 = scmp.ne.s32.totalorder %s250, %s252
      %p256 = scmp.eq.s32.totalorder %s28, 0
      %p257 = por %p255, %p256
      %p258 = scmp.ne.s32.totalorder %s250, %s252
      %p259 = scmp.eq.s32.totalorder %s33, 1
      %p260 = por %p258, %p259
      %p261 = scmp.ne.s32.totalorder %s252, %s253
      %p262 = scmp.eq.s32.totalorder %s33, 0
      %p263 = por %p261, %p262
      %p264 = scmp.ne.s32.totalorder %s252, %s253
      %p265 = scmp.eq.s32.totalorder %s34, 1
      %p266 = por %p264, %p265
      %p268 = scmp.ne.s32.totalorder %s253, %s267
      %p269 = scmp.eq.s32.totalorder %s34, 0
      %p270 = por %p268, %p269
      %s272 = sadd.s32 %s271, 1
      %p275 = scmp.eq.s32.totalorder %s28, 1
      %p276 = scmp.ne.s32.totalorder %s271, %s273
      %p277 = scmp.eq.s32.totalorder %s28, 0
      %p278 = por %p276, %p277
      %p279 = scmp.ne.s32.totalorder %s271, %s273
      %p280 = scmp.eq.s32.totalorder %s33, 1
      %p281 = por %p279, %p280
      %p282 = scmp.ne.s32.totalorder %s273, %s274
      %p283 = scmp.eq.s32.totalorder %s33, 0
      %p284 = por %p282, %p283
      %p285 = scmp.ne.s32.totalorder %s273, %s274
      %p286 = scmp.eq.s32.totalorder %s34, 1
      %p287 = por %p285, %p286
      %p289 = scmp.ne.s32.totalorder %s274, %s288
      %p290 = scmp.eq.s32.totalorder %s34, 0
      %p291 = por %p289, %p290
      %s292 = ssub.s32 %s28, %s35
      %p293 = scmp.eq.s32.totalorder %s292, 0
      %s295 = sadd.s32 %s294, 1
      %s296 = scalar_select %p293, %s294, %s295
      %p299 = pneg %p293
      %p300 = scmp.eq.s32.totalorder %s28, 1
      %p301 = por %p299, %p300
      %p302 = scmp.ne.s32.totalorder %s294, %s297
      %p303 = scmp.eq.s32.totalorder %s28, 0
      %p304 = por %p302, %p303
      %p305 = scmp.ne.s32.totalorder %s294, %s297
      %p306 = scmp.eq.s32.totalorder %s33, 1
      %p307 = por %p305, %p306
      %p308 = scmp.ne.s32.totalorder %s297, %s298
      %p309 = scmp.eq.s32.totalorder %s33, 0
      %p310 = por %p308, %p309
      %p311 = scmp.ne.s32.totalorder %s297, %s298
      %p312 = scmp.eq.s32.totalorder %s34, 1
      %p313 = por %p311, %p312
      %p315 = scmp.ne.s32.totalorder %s298, %s314
      %p316 = scmp.eq.s32.totalorder %s34, 0
      %p317 = por %p315, %p316
      %p318 = scmp.le.s32.totalorder 1, %s28
      %p319 = scmp.lt.s32.totalorder %s28, 3
      %p320 = pnand %p318, %p319
      %p321 = pneg %p320
      // Predicated region
      $region9: #{tpu_custom_call.1} parent=5 // pred_check
        _
      $region10: #{tpu_custom_call.1} parent=5 // pred_check_branch
        %323 = sbr.rel (%p320) target = $region12
      $region11: #{tpu_custom_call.1} parent=5 // pred_region
        %s324 = ssub.s32 %s28, 1
        // Predicated region
        $region13: #{tpu_custom_call.1} parent=11 // pred_check
          %p325 = pneg %p179
        $region14: #{tpu_custom_call.1} parent=11 // pred_check_branch
          %327 = sbr.rel (%p325) target = $region16
        $region15: #{tpu_custom_call.1} parent=11 // pred_region
          %329 = vsyncadd [#allocation8], 0
          %s331 = sshll.u32 %s5, 4
          %s332 = int_to_ptr.hbm [resolvable:$true] %s331
          %s333 = sshll.u32 [#allocation9], 4
          %s334 = int_to_ptr.vmem [resolvable:$true] %s333
          %336 = dma.hbm_to_vmem [thread:$0]  %s332, 64, %s334, [#allocation8]
        $region16: #{tpu_custom_call.1} parent=11 // pred_fallthru
          _
        // Predicated region
        $region17: #{tpu_custom_call.1} parent=11 // pred_check
          %p337 = pneg %p200
        $region18: #{tpu_custom_call.1} parent=11 // pred_check_branch
          %339 = sbr.rel (%p337) target = $region20
        $region19: #{tpu_custom_call.1} parent=11 // pred_region
          %341 = vsyncadd [#allocation11], 0
          %s342 = sshll.u32 %s6, 4
          %s343 = int_to_ptr.hbm [resolvable:$true] %s342
          %s344 = sshll.u32 [#allocation10], 4
          %s345 = int_to_ptr.vmem [resolvable:$true] %s344
          %350 = dma.hbm_to_vmem [thread:$0]  %s343, 256, %s345, [#allocation11], 64, 64, 4
        $region20: #{tpu_custom_call.1} parent=11 // pred_fallthru
          _
        // Predicated region
        $region21: #{tpu_custom_call.1} parent=11 // pred_check
          %p351 = pneg %p221
        $region22: #{tpu_custom_call.1} parent=11 // pred_check_branch
          %353 = sbr.rel (%p351) target = $region24
        $region23: #{tpu_custom_call.1} parent=11 // pred_region
          %355 = vsyncadd [#allocation11], 0
          %s356 = sshll.u32 %s7, 4
          %s357 = int_to_ptr.hbm [resolvable:$true] %s356
          %s358 = sshll.u32 [#allocation12], 4
          %s359 = int_to_ptr.vmem [resolvable:$true] %s358
          %364 = dma.hbm_to_vmem [thread:$0]  %s357, 256, %s359, [#allocation11], 64, 64, 4
        $region24: #{tpu_custom_call.1} parent=11 // pred_fallthru
          _
        // Predicated region
        $region25: #{tpu_custom_call.1} parent=11 // pred_check
          %p365 = pneg %p242
        $region26: #{tpu_custom_call.1} parent=11 // pred_check_branch
          %367 = sbr.rel (%p365) target = $region28
        $region27: #{tpu_custom_call.1} parent=11 // pred_region
          _
        $region28: #{tpu_custom_call.1} parent=11 // pred_fallthru
          _
        // Predicated region
        $region29: #{tpu_custom_call.1} parent=11 // pred_check
          %p368 = pneg %p263
        $region30: #{tpu_custom_call.1} parent=11 // pred_check_branch
          %370 = sbr.rel (%p368) target = $region32
        $region31: #{tpu_custom_call.1} parent=11 // pred_region
          %372 = vsyncadd [#allocation14], 0
          %s374 = sshll.u32 %s9, 4
          %s375 = int_to_ptr.hbm [resolvable:$true] %s374
          %s376 = sshll.u32 [#allocation13], 4
          %s377 = int_to_ptr.vmem [resolvable:$true] %s376
          %379 = dma.hbm_to_vmem [thread:$0]  %s375, 16, %s377, [#allocation14]
        $region32: #{tpu_custom_call.1} parent=11 // pred_fallthru
          _
        // Predicated region
        $region33: #{tpu_custom_call.1} parent=11 // pred_check
          %p380 = pneg %p284
        $region34: #{tpu_custom_call.1} parent=11 // pred_check_branch
          %382 = sbr.rel (%p380) target = $region36
        $region35: #{tpu_custom_call.1} parent=11 // pred_region
          _
        $region36: #{tpu_custom_call.1} parent=11 // pred_fallthru
          _
      $region12: #{tpu_custom_call.1} parent=5 // pred_fallthru
        _
      %p383 = scmp.lt.s32.totalorder %s28, 2
      // Predicated region
      $region37: #{tpu_custom_call.1} parent=5 // pred_check
        %p384 = pneg %p383
      $region38: #{tpu_custom_call.1} parent=5 // pred_check_branch
        %386 = sbr.rel (%p384) target = $region40
      $region39: #{tpu_custom_call.1} parent=5 // pred_region
        // Predicated region
        $region41: #{tpu_custom_call.1} parent=39 // pred_check
          %p387 = pneg %p48
        $region42: #{tpu_custom_call.1} parent=39 // pred_check_branch
          %389 = sbr.rel (%p387) target = $region44
        $region43: #{tpu_custom_call.1} parent=39 // pred_region
          %s390 = sand.u32 %s38, 1
          %s391 = sand.u32 %s38, 1
          %s392 = smul.addr %s391, 16
          %s393 = scalar_lea.vmem [#allocation2], %s392
          %s394 = smul.addr %s28, 4
          %s395 = scalar_lea.vmem %s0, %s394
          // Predicated region
          $region45: #{tpu_custom_call.1} parent=43 // pred_check
            _
          $region46: #{tpu_custom_call.1} parent=43 // pred_check_branch
            %397 = sbr.rel (0) target = $region48
          $region47: #{tpu_custom_call.1} parent=43 // pred_region
            // Predicated region
            $region49: #{tpu_custom_call.1} parent=47 // pred_check
              _
            $region50: #{tpu_custom_call.1} parent=47 // pred_check_branch
              %399 = sbr.rel target = $region52
            $region51: #{tpu_custom_call.1} parent=47 // pred_region
              // Predicated region
              $region64: #{tpu_custom_call.1} parent=51 // pred_check
                _
              $region65: #{tpu_custom_call.1} parent=51 // pred_check_branch
                %421 = sbr.rel (0) target = $region67
              $region66: #{tpu_custom_call.1} parent=51 // pred_region
                loop: start=0, step=1, limit=1
                $region68: #{tpu_custom_call.1} parent=66 // loop_pre_header
                  _
                $region69: #{tpu_custom_call.1} parent=66 // loop_header
                  %s423 = sphi 0, %s427
                  %p424 = scmp.ge.s32.totalorder %s423, 1
                  %s428 = sphi %s395, %s395
                  %s429 = sphi %s393, %s393
                $region70: #{tpu_custom_call.1} parent=66 // loop_header_branch
                  %426 = sbr.rel (%p424) target = $region74
                $region71: #{tpu_custom_call.1} parent=66 // loop_body
                  _
                $region72: #{tpu_custom_call.1} parent=66 // loop_footer
                  %s427 = sadd.s32 1, %s423
                $region73: #{tpu_custom_call.1} parent=66 // loop_footer_branch
                  %422 = sbr.rel target = $region69
                $region74: #{tpu_custom_call.1} parent=66 // loop_exit
                  _
                %s431 = ssub.s32 16, 1
                loop: start=0, step=1, limit=1
                $region75: #{tpu_custom_call.1} parent=66 // loop_pre_header
                  _
                $region76: #{tpu_custom_call.1} parent=66 // loop_header
                  %s433 = sphi 0, %s437
                  %p434 = scmp.ge.s32.totalorder %s433, 1
                  %s438 = sphi %s395, %s395
                  %s439 = sphi %s393, %s393
                $region77: #{tpu_custom_call.1} parent=66 // loop_header_branch
                  %436 = sbr.rel (%p434) target = $region81
                $region78: #{tpu_custom_call.1} parent=66 // loop_body
                  %v440 = vld [vmem:[%s438] sm:%s431]
                  %441 = vst [vmem:[%s439] sm:%s431] %v440
                  %v442 = vld [vmem:[%s438 + $0x8] sm:%s431]
                  %443 = vst [vmem:[%s439 + $0x4] sm:%s431] %v442
                  %v444 = vld [vmem:[%s438 + $0x10] sm:%s431]
                  %445 = vst [vmem:[%s439 + $0x8] sm:%s431] %v444
                  %v446 = vld [vmem:[%s438 + $0x18] sm:%s431]
                  %447 = vst [vmem:[%s439 + $0xc] sm:%s431] %v446
                $region79: #{tpu_custom_call.1} parent=66 // loop_footer
                  %s437 = sadd.s32 1, %s433
                $region80: #{tpu_custom_call.1} parent=66 // loop_footer_branch
                  %432 = sbr.rel target = $region76
                $region81: #{tpu_custom_call.1} parent=66 // loop_exit
                  _
              $region67: #{tpu_custom_call.1} parent=51 // pred_fallthru
                _
            $region52: #{tpu_custom_call.1} parent=47 // pred_fallthru
              _
            // Predicated region
            $region53: #{tpu_custom_call.1} parent=47 // pred_check
              _
            $region54: #{tpu_custom_call.1} parent=47 // pred_check_branch
              %401 = sbr.rel (0) target = $region56
            $region55: #{tpu_custom_call.1} parent=47 // pred_region
              %s403 = ssub.s32 16, 1
              loop: start=0, step=1, limit=1
              $region57: #{tpu_custom_call.1} parent=55 // loop_pre_header
                _
              $region58: #{tpu_custom_call.1} parent=55 // loop_header
                %s405 = sphi 0, %s409
                %p406 = scmp.ge.s32.totalorder %s405, 1
                %s410 = sphi %s395, %s395
                %s411 = sphi %s393, %s393
              $region59: #{tpu_custom_call.1} parent=55 // loop_header_branch
                %408 = sbr.rel (%p406) target = $region63
              $region60: #{tpu_custom_call.1} parent=55 // loop_body
                %v412 = vld [vmem:[%s410] sm:%s403]
                %413 = vst [vmem:[%s411] sm:%s403] %v412
                %v414 = vld [vmem:[%s410 + $0x8] sm:%s403]
                %415 = vst [vmem:[%s411 + $0x4] sm:%s403] %v414
                %v416 = vld [vmem:[%s410 + $0x10] sm:%s403]
                %417 = vst [vmem:[%s411 + $0x8] sm:%s403] %v416
                %v418 = vld [vmem:[%s410 + $0x18] sm:%s403]
                %419 = vst [vmem:[%s411 + $0xc] sm:%s403] %v418
              $region61: #{tpu_custom_call.1} parent=55 // loop_footer
                %s409 = sadd.s32 1, %s405
              $region62: #{tpu_custom_call.1} parent=55 // loop_footer_branch
                %404 = sbr.rel target = $region58
              $region63: #{tpu_custom_call.1} parent=55 // loop_exit
                _
            $region56: #{tpu_custom_call.1} parent=47 // pred_fallthru
              _
          $region48: #{tpu_custom_call.1} parent=43 // pred_fallthru
            _
          %448 = vnop
        $region44: #{tpu_custom_call.1} parent=39 // pred_fallthru
          _
        // Predicated region
        $region82: #{tpu_custom_call.1} parent=39 // pred_check
          %p449 = pneg %p74
        $region83: #{tpu_custom_call.1} parent=39 // pred_check_branch
          %451 = sbr.rel (%p449) target = $region85
        $region84: #{tpu_custom_call.1} parent=39 // pred_region
          %s452 = sand.u32 %s64, 1
          %s453 = sand.u32 %s64, 1
          %s454 = smul.addr %s453, 16
          %s455 = scalar_lea.vmem [#allocation3], %s454
          %s456 = smul.addr %s28, 4
          %s457 = scalar_lea.vmem %s1, %s456
          // Predicated region
          $region86: #{tpu_custom_call.1} parent=84 // pred_check
            _
          $region87: #{tpu_custom_call.1} parent=84 // pred_check_branch
            %459 = sbr.rel (0) target = $region89
          $region88: #{tpu_custom_call.1} parent=84 // pred_region
            // Predicated region
            $region90: #{tpu_custom_call.1} parent=88 // pred_check
              _
            $region91: #{tpu_custom_call.1} parent=88 // pred_check_branch
              %461 = sbr.rel target = $region93
            $region92: #{tpu_custom_call.1} parent=88 // pred_region
              // Predicated region
              $region105: #{tpu_custom_call.1} parent=92 // pred_check
                _
              $region106: #{tpu_custom_call.1} parent=92 // pred_check_branch
                %483 = sbr.rel (0) target = $region108
              $region107: #{tpu_custom_call.1} parent=92 // pred_region
                loop: start=0, step=1, limit=1
                $region109: #{tpu_custom_call.1} parent=107 // loop_pre_header
                  _
                $region110: #{tpu_custom_call.1} parent=107 // loop_header
                  %s485 = sphi 0, %s489
                  %p486 = scmp.ge.s32.totalorder %s485, 1
                  %s490 = sphi %s457, %s457
                  %s491 = sphi %s455, %s455
                $region111: #{tpu_custom_call.1} parent=107 // loop_header_branch
                  %488 = sbr.rel (%p486) target = $region115
                $region112: #{tpu_custom_call.1} parent=107 // loop_body
                  _
                $region113: #{tpu_custom_call.1} parent=107 // loop_footer
                  %s489 = sadd.s32 1, %s485
                $region114: #{tpu_custom_call.1} parent=107 // loop_footer_branch
                  %484 = sbr.rel target = $region110
                $region115: #{tpu_custom_call.1} parent=107 // loop_exit
                  _
                %s493 = ssub.s32 16, 1
                loop: start=0, step=1, limit=1
                $region116: #{tpu_custom_call.1} parent=107 // loop_pre_header
                  _
                $region117: #{tpu_custom_call.1} parent=107 // loop_header
                  %s495 = sphi 0, %s499
                  %p496 = scmp.ge.s32.totalorder %s495, 1
                  %s500 = sphi %s457, %s457
                  %s501 = sphi %s455, %s455
                $region118: #{tpu_custom_call.1} parent=107 // loop_header_branch
                  %498 = sbr.rel (%p496) target = $region122
                $region119: #{tpu_custom_call.1} parent=107 // loop_body
                  %v502 = vld [vmem:[%s500] sm:%s493]
                  %503 = vst [vmem:[%s501] sm:%s493] %v502
                  %v504 = vld [vmem:[%s500 + $0x8] sm:%s493]
                  %505 = vst [vmem:[%s501 + $0x4] sm:%s493] %v504
                  %v506 = vld [vmem:[%s500 + $0x10] sm:%s493]
                  %507 = vst [vmem:[%s501 + $0x8] sm:%s493] %v506
                  %v508 = vld [vmem:[%s500 + $0x18] sm:%s493]
                  %509 = vst [vmem:[%s501 + $0xc] sm:%s493] %v508
                $region120: #{tpu_custom_call.1} parent=107 // loop_footer
                  %s499 = sadd.s32 1, %s495
                $region121: #{tpu_custom_call.1} parent=107 // loop_footer_branch
                  %494 = sbr.rel target = $region117
                $region122: #{tpu_custom_call.1} parent=107 // loop_exit
                  _
              $region108: #{tpu_custom_call.1} parent=92 // pred_fallthru
                _
            $region93: #{tpu_custom_call.1} parent=88 // pred_fallthru
              _
            // Predicated region
            $region94: #{tpu_custom_call.1} parent=88 // pred_check
              _
            $region95: #{tpu_custom_call.1} parent=88 // pred_check_branch
              %463 = sbr.rel (0) target = $region97
            $region96: #{tpu_custom_call.1} parent=88 // pred_region
              %s465 = ssub.s32 16, 1
              loop: start=0, step=1, limit=1
              $region98: #{tpu_custom_call.1} parent=96 // loop_pre_header
                _
              $region99: #{tpu_custom_call.1} parent=96 // loop_header
                %s467 = sphi 0, %s471
                %p468 = scmp.ge.s32.totalorder %s467, 1
                %s472 = sphi %s457, %s457
                %s473 = sphi %s455, %s455
              $region100: #{tpu_custom_call.1} parent=96 // loop_header_branch
                %470 = sbr.rel (%p468) target = $region104
              $region101: #{tpu_custom_call.1} parent=96 // loop_body
                %v474 = vld [vmem:[%s472] sm:%s465]
                %475 = vst [vmem:[%s473] sm:%s465] %v474
                %v476 = vld [vmem:[%s472 + $0x8] sm:%s465]
                %477 = vst [vmem:[%s473 + $0x4] sm:%s465] %v476
                %v478 = vld [vmem:[%s472 + $0x10] sm:%s465]
                %479 = vst [vmem:[%s473 + $0x8] sm:%s465] %v478
                %v480 = vld [vmem:[%s472 + $0x18] sm:%s465]
                %481 = vst [vmem:[%s473 + $0xc] sm:%s465] %v480
              $region102: #{tpu_custom_call.1} parent=96 // loop_footer
                %s471 = sadd.s32 1, %s467
              $region103: #{tpu_custom_call.1} parent=96 // loop_footer_branch
                %466 = sbr.rel target = $region99
              $region104: #{tpu_custom_call.1} parent=96 // loop_exit
                _
            $region97: #{tpu_custom_call.1} parent=88 // pred_fallthru
              _
          $region89: #{tpu_custom_call.1} parent=84 // pred_fallthru
            _
          %510 = vnop
        $region85: #{tpu_custom_call.1} parent=39 // pred_fallthru
          _
        // Predicated region
        $region123: #{tpu_custom_call.1} parent=39 // pred_check
          %p511 = pneg %p100
        $region124: #{tpu_custom_call.1} parent=39 // pred_check_branch
          %513 = sbr.rel (%p511) target = $region126
        $region125: #{tpu_custom_call.1} parent=39 // pred_region
          %s514 = sand.u32 %s90, 1
          %s515 = scalar_lea.sflag [#allocation5], %s514
          %s516 = sand.u32 %s90, 1
          %s517 = smul.addr %s516, 16
          %s518 = scalar_lea.vmem [#allocation4], %s517
          %520 = vsyncadd %s515, 0
          %s521 = smul.addr %s28, 4
          %s522 = scalar_lea.hbm %s2, %s521
          %s523 = sshll.u32 %s522, 4
          %s524 = int_to_ptr.hbm [resolvable:$true] %s523
          %s525 = sshll.u32 %s518, 4
          %s526 = int_to_ptr.vmem [resolvable:$true] %s525
          %531 = dma.hbm_to_vmem [thread:$0]  %s524, 256, %s526, %s515, 128, 64, 4
        $region126: #{tpu_custom_call.1} parent=39 // pred_fallthru
          _
        // Predicated region
        $region127: #{tpu_custom_call.1} parent=39 // pred_check
          %p532 = pneg %p126
        $region128: #{tpu_custom_call.1} parent=39 // pred_check_branch
          %534 = sbr.rel (%p532) target = $region130
        $region129: #{tpu_custom_call.1} parent=39 // pred_region
          %p535 = scmp.lt.s32.totalorder %s28, 1
          %s536 = scalar_select %p535, %s28, 1
          %s537 = smul.addr %s536, 8
          %s538 = scalar_lea.vmem %s3, %s537
        $region130: #{tpu_custom_call.1} parent=39 // pred_fallthru
          _
        // Predicated region
        $region131: #{tpu_custom_call.1} parent=39 // pred_check
          %p539 = pneg %p152
        $region132: #{tpu_custom_call.1} parent=39 // pred_check_branch
          %541 = sbr.rel (%p539) target = $region134
        $region133: #{tpu_custom_call.1} parent=39 // pred_region
          %s542 = sand.u32 %s28, 1
          %s543 = scalar_lea.sflag [#allocation8], %s542
          %s544 = sand.u32 %s142, 1
          %s545 = smul.addr %s544, 8
          %s546 = scalar_lea.vmem [#allocation7], %s545
          %548 = vsyncadd %s543, 0
          %s549 = smul.addr %s28, 8
          %s550 = scalar_lea.hbm %s4, %s549
          %s552 = sshll.u32 %s550, 4
          %s553 = int_to_ptr.hbm [resolvable:$true] %s552
          %s554 = sshll.u32 %s546, 4
          %s555 = int_to_ptr.vmem [resolvable:$true] %s554
          %557 = dma.hbm_to_vmem [thread:$0]  %s553, 128, %s555, %s543
        $region134: #{tpu_custom_call.1} parent=39 // pred_fallthru
          _
      $region40: #{tpu_custom_call.1} parent=5 // pred_fallthru
        _
      %p558 = scmp.le.s32.totalorder 1, %s28
      %p559 = scmp.lt.s32.totalorder %s28, 3
      %p560 = pnand %p558, %p559
      %p561 = pneg %p560
      // Predicated region
      $region135: #{tpu_custom_call.1} parent=5 // pred_check
        _
      $region136: #{tpu_custom_call.1} parent=5 // pred_check_branch
        %563 = sbr.rel (%p560) target = $region138
      $region137: #{tpu_custom_call.1} parent=5 // pred_region
        %s564 = ssub.s32 %s28, 1
        %s565 = sand.u32 %s41, 1
        %s566 = sand.u32 %s41, 1
        %s567 = smul.addr %s566, 16
        %s568 = scalar_lea.vmem [#allocation2], %s567
        // Predicated region
        $region139: #{tpu_custom_call.1} parent=137 // pred_check
          %p569 = pneg %p54
        $region140: #{tpu_custom_call.1} parent=137 // pred_check_branch
          %571 = sbr.rel (%p569) target = $region142
        $region141: #{tpu_custom_call.1} parent=137 // pred_region
          _
        $region142: #{tpu_custom_call.1} parent=137 // pred_fallthru
          _
        %s572 = sand.u32 %s67, 1
        %s573 = sand.u32 %s67, 1
        %s574 = smul.addr %s573, 16
        %s575 = scalar_lea.vmem [#allocation3], %s574
        // Predicated region
        $region143: #{tpu_custom_call.1} parent=137 // pred_check
          %p576 = pneg %p80
        $region144: #{tpu_custom_call.1} parent=137 // pred_check_branch
          %578 = sbr.rel (%p576) target = $region146
        $region145: #{tpu_custom_call.1} parent=137 // pred_region
          _
        $region146: #{tpu_custom_call.1} parent=137 // pred_fallthru
          _
        %s579 = sand.u32 %s93, 1
        %s580 = scalar_lea.sflag [#allocation5], %s579
        %s581 = sand.u32 %s93, 1
        %s582 = smul.addr %s581, 16
        %s583 = scalar_lea.vmem [#allocation4], %s582
        // Predicated region
        $region147: #{tpu_custom_call.1} parent=137 // pred_check
          %p584 = pneg %p106
        $region148: #{tpu_custom_call.1} parent=137 // pred_check_branch
          %586 = sbr.rel (%p584) target = $region150
        $region149: #{tpu_custom_call.1} parent=137 // pred_region
          %588 = dma.done %s580, 256
        $region150: #{tpu_custom_call.1} parent=137 // pred_fallthru
          _
        %s589 = sand.u32 %s33, 1
        %s590 = scalar_lea.sflag [#allocation8], %s589
        %s591 = sand.u32 %s145, 1
        %s592 = smul.addr %s591, 8
        %s593 = scalar_lea.vmem [#allocation7], %s592
        // Predicated region
        $region151: #{tpu_custom_call.1} parent=137 // pred_check
          %p594 = pneg %p158
        $region152: #{tpu_custom_call.1} parent=137 // pred_check_branch
          %596 = sbr.rel (%p594) target = $region154
        $region153: #{tpu_custom_call.1} parent=137 // pred_region
          %598 = dma.done %s590, 128
        $region154: #{tpu_custom_call.1} parent=137 // pred_fallthru
          _
        // Predicated region
        $region155: #{tpu_custom_call.1} parent=137 // pred_check
          %p599 = pneg %p179
        $region156: #{tpu_custom_call.1} parent=137 // pred_check_branch
          %601 = sbr.rel (%p599) target = $region158
        $region157: #{tpu_custom_call.1} parent=137 // pred_region
          %603 = dma.done [#allocation8], 64
        $region158: #{tpu_custom_call.1} parent=137 // pred_fallthru
          _
        // Predicated region
        $region159: #{tpu_custom_call.1} parent=137 // pred_check
          %p604 = pneg %p200
        $region160: #{tpu_custom_call.1} parent=137 // pred_check_branch
          %606 = sbr.rel (%p604) target = $region162
        $region161: #{tpu_custom_call.1} parent=137 // pred_region
          %608 = dma.done [#allocation11], 256
        $region162: #{tpu_custom_call.1} parent=137 // pred_fallthru
          _
        // Predicated region
        $region163: #{tpu_custom_call.1} parent=137 // pred_check
          %p609 = pneg %p221
        $region164: #{tpu_custom_call.1} parent=137 // pred_check_branch
          %611 = sbr.rel (%p609) target = $region166
        $region165: #{tpu_custom_call.1} parent=137 // pred_region
          %613 = dma.done [#allocation11], 256
        $region166: #{tpu_custom_call.1} parent=137 // pred_fallthru
          _
        // Predicated region
        $region167: #{tpu_custom_call.1} parent=137 // pred_check
          %p614 = pneg %p263
        $region168: #{tpu_custom_call.1} parent=137 // pred_check_branch
          %616 = sbr.rel (%p614) target = $region170
        $region169: #{tpu_custom_call.1} parent=137 // pred_region
          %618 = dma.done [#allocation14], 16
        $region170: #{tpu_custom_call.1} parent=137 // pred_fallthru
          _
        %s619 = sand.u32 %s41, 1
        %s620 = sand.u32 %s41, 1
        %s621 = smul.addr %s620, 16
        %s622 = scalar_lea.vmem [#allocation2], %s621
        %p623 = pneg %p54
        %p624 = pneg %p51
        %s625 = sand.u32 %s67, 1
        %s626 = sand.u32 %s67, 1
        %s627 = smul.addr %s626, 16
        %s628 = scalar_lea.vmem [#allocation3], %s627
        %p629 = pneg %p80
        %p630 = pneg %p77
        %s631 = sand.u32 %s93, 1
        %s632 = scalar_lea.sflag [#allocation5], %s631
        %s633 = sand.u32 %s93, 1
        %s634 = smul.addr %s633, 16
        %s635 = scalar_lea.vmem [#allocation4], %s634
        %p636 = pneg %p106
        %p637 = pneg %p103
        %p638 = scmp.lt.s32.totalorder %s33, 1
        %s639 = scalar_select %p638, %s33, 1
        %s640 = smul.addr %s639, 8
        %s641 = scalar_lea.vmem %s3, %s640
        %p642 = pneg %p132
        %p643 = pneg %p129
        %s644 = sand.u32 %s33, 1
        %s645 = scalar_lea.sflag [#allocation8], %s644
        %s646 = sand.u32 %s145, 1
        %s647 = smul.addr %s646, 8
        %s648 = scalar_lea.vmem [#allocation7], %s647
        %p649 = pneg %p158
        %p650 = pneg %p155
        %p651 = pneg %p179
        %p652 = pneg %p176
        %p653 = pneg %p200
        %p654 = pneg %p197
        %p655 = pneg %p221
        %p656 = pneg %p218
        %p657 = pneg %p242
        %p658 = pneg %p239
        %p659 = pneg %p263
        %p660 = pneg %p260
        %p661 = pneg %p284
        %p662 = pneg %p281
        %p663 = pneg %p310
        %p664 = pneg %p307
        %s665 = sand.u32 %s297, 1
        %s666 = scalar_lea.sflag [#allocation6], %s665
        %s667 = sand.u32 %s297, 1
        %s668 = smul.addr %s667, 8
        %s669 = scalar_lea.vmem [#allocation15], %s668
        %p670 = scmp.lt.s32.totalorder %s33, 1
        %s671 = scalar_select %p670, %s33, 1
        %s672 = smul.addr %s671, 8
        %s673 = scalar_lea.vmem %s3, %s672
        %v675 = vld [vmem:[%s568] sm:$0xf]
        %v676 = vld [vmem:[%s568 + $0x4] sm:$0xf]
        %v677 = vld [vmem:[%s568 + $0x8] sm:$0xf]
        %v678 = vld [vmem:[%s568 + $0xc] sm:$0xf]
        %v679 = vld [vmem:[%s575] sm:$0xf]
        %v680 = vld [vmem:[%s575 + $0x4] sm:$0xf]
        %v681 = vld [vmem:[%s575 + $0x8] sm:$0xf]
        %v682 = vld [vmem:[%s575 + $0xc] sm:$0xf]
        %v683 = vld [vmem:[%s583] sm:$0xf]
        %v684 = vld [vmem:[%s583 + $0x4] sm:$0xf]
        %v685 = vld [vmem:[%s583 + $0x8] sm:$0xf]
        %v686 = vld [vmem:[%s583 + $0xc] sm:$0xf]
        %v687 = vld [vmem:[#allocation9] sm:$0xf]
        %v692 = vunpack.c.l.b16 %v679
        %v693 = vunpack.c.l.b16 %v680
        %v694 = vunpack.c.l.b16 %v681
        %v695 = vunpack.c.l.b16 %v682
        %v696 = vpack.c.b16 %v693, %v692
        %v697 = vpack.c.b16 %v695, %v694
        %vm698 = vcmask 64512
        %v700 = vsel %vm698, %v696, 0
        %v703 = vsel %vm698, %v697, 0
        %vm705 = vcmask 1043456
        %v707 = vsel %vm705, %v687, 0
        %709 = vmatpush.bf16.msra.mxu0 0
        %710 = vmatpush.bf16.msra.mxu0 0
        %711 = vmatpush.bf16.msra.mxu0 0
        %712 = vmatpush.bf16.msra.mxu0 0
        %713 = vmatpush.bf16.msra.mxu0 0
        %714 = vmatpush.bf16.msra.mxu0 0
        %715 = vmatpush.bf16.msra.mxu0 0
        %716 = vmatpush.bf16.msra.mxu0 %v707
        %717 = vmatmul.bf16.gmra.mxu0 %v700
        %v718 = vpop.f32.mrf.mxu0
        %v719 = vadd.f32 0.0, %v718
        %v720 = vpop.f32.mrf.mxu0
        %v721 = vadd.f32 0.0, %v720
        %722 = vmatmul.bf16.gmra.mxu0 %v703
        %v723 = vpop.f32.mrf.mxu0
        %v724 = vadd.f32 0.0, %v723
        %v725 = vpop.f32.mrf.mxu0
        %v726 = vadd.f32 0.0, %v725
        %727 = vdwg.mxu0
        %v728 = vpack.c.bf16 %v719, %v719
        %v729 = vpack.c.bf16 %v721, %v721
        %v730 = vpack.c.bf16 %v724, %v724
        %v731 = vpack.c.bf16 %v726, %v726
        %v733 = vsel %vm698, %v675, 0
        %v736 = vsel %vm698, %v728, 0
        %738 = vmatpush.bf16.xpose.msra.mxu0 0
        %739 = vmatpush.bf16.xpose.msra.mxu0 0
        %740 = vmatpush.bf16.xpose.msra.mxu0 0
        %741 = vmatpush.bf16.xpose.msra.mxu0 0
        %742 = vmatpush.bf16.xpose.msra.mxu0 0
        %743 = vmatpush.bf16.xpose.msra.mxu0 0
        %744 = vmatpush.bf16.xpose.msra.mxu0 0
        %745 = vmatpush.bf16.xpose.msra.mxu0 %v736
        %746 = vmatmul.bf16.gmra.mxu0 %v733
        %v747 = vpop.f32.mrf.mxu0
        %v748 = vadd.f32 0.0, %v747
        %v749 = vpop.f32.mrf.mxu0
        %750 = vdwg.mxu0
        %v752 = vsel %vm698, %v676, 0
        %v755 = vsel %vm698, %v729, 0
        %757 = vmatpush.bf16.xpose.msra.mxu0 0
        %758 = vmatpush.bf16.xpose.msra.mxu0 0
        %759 = vmatpush.bf16.xpose.msra.mxu0 0
        %760 = vmatpush.bf16.xpose.msra.mxu0 0
        %761 = vmatpush.bf16.xpose.msra.mxu0 0
        %762 = vmatpush.bf16.xpose.msra.mxu0 0
        %763 = vmatpush.bf16.xpose.msra.mxu0 0
        %764 = vmatpush.bf16.xpose.msra.mxu0 %v755
        %765 = vmatmul.bf16.gmra.mxu0 %v752
        %v766 = vpop.f32.mrf.mxu0
        %v767 = vadd.f32 0.0, %v766
        %v768 = vpop.f32.mrf.mxu0
        %769 = vdwg.mxu0
        %v771 = vsel %vm698, %v677, 0
        %v774 = vsel %vm698, %v730, 0
        %776 = vmatpush.bf16.xpose.msra.mxu0 0
        %777 = vmatpush.bf16.xpose.msra.mxu0 0
        %778 = vmatpush.bf16.xpose.msra.mxu0 0
        %779 = vmatpush.bf16.xpose.msra.mxu0 0
        %780 = vmatpush.bf16.xpose.msra.mxu0 0
        %781 = vmatpush.bf16.xpose.msra.mxu0 0
        %782 = vmatpush.bf16.xpose.msra.mxu0 0
        %783 = vmatpush.bf16.xpose.msra.mxu0 %v774
        %784 = vmatmul.bf16.gmra.mxu0 %v771
        %v785 = vpop.f32.mrf.mxu0
        %v786 = vadd.f32 0.0, %v785
        %v787 = vpop.f32.mrf.mxu0
        %788 = vdwg.mxu0
        %v790 = vsel %vm698, %v678, 0
        %v793 = vsel %vm698, %v731, 0
        %795 = vmatpush.bf16.xpose.msra.mxu0 0
        %796 = vmatpush.bf16.xpose.msra.mxu0 0
        %797 = vmatpush.bf16.xpose.msra.mxu0 0
        %798 = vmatpush.bf16.xpose.msra.mxu0 0
        %799 = vmatpush.bf16.xpose.msra.mxu0 0
        %800 = vmatpush.bf16.xpose.msra.mxu0 0
        %801 = vmatpush.bf16.xpose.msra.mxu0 0
        %802 = vmatpush.bf16.xpose.msra.mxu0 %v793
        %803 = vmatmul.bf16.gmra.mxu0 %v790
        %v804 = vpop.f32.mrf.mxu0
        %v805 = vadd.f32 0.0, %v804
        %v806 = vpop.f32.mrf.mxu0
        %807 = vdwg.mxu0
        %v808 = vld [vmem:[%s593] sm:$0xff]
        %v809 = vadd.f32 %v748, %v808
        %v810 = vadd.f32 %v767, %v808
        %v811 = vadd.f32 %v786, %v808
        %v812 = vadd.f32 %v805, %v808
        %v813 = vsel %vm698, %v809, -inf
        %814 = vmax.xlane.f32.xlu0 %v813
        %v815 = vpop.xlane.xlu0 %814
        %v816 = vsel %vm698, %v810, -inf
        %817 = vmax.xlane.f32.xlu0 %v816
        %v818 = vpop.xlane.xlu0 %817
        %v819 = vsel %vm698, %v811, -inf
        %820 = vmax.xlane.f32.xlu0 %v819
        %v821 = vpop.xlane.xlu0 %820
        %v822 = vsel %vm698, %v812, -inf
        %823 = vmax.xlane.f32.xlu0 %v822
        %v824 = vpop.xlane.xlu0 %823
        %v825 = vsub.f32 %v809, %v815
        %v826 = vsub.f32 %v810, %v818
        %v827 = vsub.f32 %v811, %v821
        %v828 = vsub.f32 %v812, %v824
        %v829 = vmul.f32 %v825, 1.442695
        %v830 = vpow.pop %v829
        %v831 = vmul.f32 %v826, 1.442695
        %v832 = vpow.pop %v831
        %v833 = vmul.f32 %v827, 1.442695
        %v834 = vpow.pop %v833
        %v835 = vmul.f32 %v828, 1.442695
        %v836 = vpow.pop %v835
        %v837 = vsel %vm698, %v830, 0.0
        %838 = vadd.xlane.f32.xlu0 %v837
        %v839 = vpop.xlane.xlu0 %838
        %v840 = vsel %vm698, %v832, 0.0
        %841 = vadd.xlane.f32.xlu0 %v840
        %v842 = vpop.xlane.xlu0 %841
        %v843 = vsel %vm698, %v834, 0.0
        %844 = vadd.xlane.f32.xlu0 %v843
        %v845 = vpop.xlane.xlu0 %844
        %v846 = vsel %vm698, %v836, 0.0
        %847 = vadd.xlane.f32.xlu0 %v846
        %v848 = vpop.xlane.xlu0 %847
        %v849 = vrcp.pop %v839
        %v850 = vrcp.pop %v842
        %v851 = vrcp.pop %v845
        %v852 = vrcp.pop %v848
        %v853 = vmul.f32 %v830, %v849
        %v854 = vmul.f32 %v832, %v850
        %v855 = vmul.f32 %v834, %v851
        %v856 = vmul.f32 %v836, %v852
        %v857 = vpack.c.bf16 %v853, %v853
        %v858 = vpack.c.bf16 %v854, %v854
        %v859 = vpack.c.bf16 %v855, %v855
        %v860 = vpack.c.bf16 %v856, %v856
        %v862 = vsel %vm698, %v857, 0
        %v865 = vsel %vm705, %v683, 0
        %867 = vmatpush.bf16.msra.mxu0 0
        %868 = vmatpush.bf16.msra.mxu0 0
        %869 = vmatpush.bf16.msra.mxu0 0
        %870 = vmatpush.bf16.msra.mxu0 0
        %871 = vmatpush.bf16.msra.mxu0 0
        %872 = vmatpush.bf16.msra.mxu0 0
        %873 = vmatpush.bf16.msra.mxu0 0
        %874 = vmatpush.bf16.msra.mxu0 %v865
        %875 = vmatmul.bf16.gmra.mxu0 %v862
        %v876 = vpop.f32.mrf.mxu0
        %v877 = vadd.f32 0.0, %v876
        %v878 = vpop.f32.mrf.mxu0
        %879 = vdwg.mxu0
        %v881 = vsel %vm698, %v858, 0
        %v884 = vsel %vm705, %v684, 0
        %886 = vmatpush.bf16.msra.mxu0 0
        %887 = vmatpush.bf16.msra.mxu0 0
        %888 = vmatpush.bf16.msra.mxu0 0
        %889 = vmatpush.bf16.msra.mxu0 0
        %890 = vmatpush.bf16.msra.mxu0 0
        %891 = vmatpush.bf16.msra.mxu0 0
        %892 = vmatpush.bf16.msra.mxu0 0
        %893 = vmatpush.bf16.msra.mxu0 %v884
        %894 = vmatmul.bf16.gmra.mxu0 %v881
        %v895 = vpop.f32.mrf.mxu0
        %v896 = vadd.f32 0.0, %v895
        %v897 = vpop.f32.mrf.mxu0
        %898 = vdwg.mxu0
        %v900 = vsel %vm698, %v859, 0
        %v903 = vsel %vm705, %v685, 0
        %905 = vmatpush.bf16.msra.mxu0 0
        %906 = vmatpush.bf16.msra.mxu0 0
        %907 = vmatpush.bf16.msra.mxu0 0
        %908 = vmatpush.bf16.msra.mxu0 0
        %909 = vmatpush.bf16.msra.mxu0 0
        %910 = vmatpush.bf16.msra.mxu0 0
        %911 = vmatpush.bf16.msra.mxu0 0
        %912 = vmatpush.bf16.msra.mxu0 %v903
        %913 = vmatmul.bf16.gmra.mxu0 %v900
        %v914 = vpop.f32.mrf.mxu0
        %v915 = vadd.f32 0.0, %v914
        %v916 = vpop.f32.mrf.mxu0
        %917 = vdwg.mxu0
        %v919 = vsel %vm698, %v860, 0
        %v922 = vsel %vm705, %v686, 0
        %924 = vmatpush.bf16.msra.mxu0 0
        %925 = vmatpush.bf16.msra.mxu0 0
        %926 = vmatpush.bf16.msra.mxu0 0
        %927 = vmatpush.bf16.msra.mxu0 0
        %928 = vmatpush.bf16.msra.mxu0 0
        %929 = vmatpush.bf16.msra.mxu0 0
        %930 = vmatpush.bf16.msra.mxu0 0
        %931 = vmatpush.bf16.msra.mxu0 %v922
        %932 = vmatmul.bf16.gmra.mxu0 %v919
        %v933 = vpop.f32.mrf.mxu0
        %v934 = vadd.f32 0.0, %v933
        %v935 = vpop.f32.mrf.mxu0
        %936 = vdwg.mxu0
        %v937 = vpack.c.bf16 %v877, %v877
        %v938 = vpack.c.bf16 %v896, %v896
        %v939 = vpack.c.bf16 %v915, %v915
        %v940 = vpack.c.bf16 %v934, %v934
        %v941 = vld [vmem:[#allocation10] sm:$0xf]
        %s942 = scalar_lea.vmem [#allocation10], 4
        %v943 = vld [vmem:[%s942] sm:$0xf]
        %v945 = vsel %vm698, %v938, 0
        %v948 = vsel %vm705, %v943, 0
        %950 = vmatpush.bf16.msra.mxu0 0
        %951 = vmatpush.bf16.msra.mxu0 0
        %952 = vmatpush.bf16.msra.mxu0 0
        %953 = vmatpush.bf16.msra.mxu0 0
        %954 = vmatpush.bf16.msra.mxu0 0
        %955 = vmatpush.bf16.msra.mxu0 0
        %956 = vmatpush.bf16.msra.mxu0 0
        %957 = vmatpush.bf16.msra.mxu0 %v948
        %958 = vmatmul.bf16.gmra.mxu0 %v945
        %v959 = vpop.f32.mrf.mxu0
        %v960 = vadd.f32 0.0, %v959
        %v961 = vpop.f32.mrf.mxu0
        %962 = vdwg.mxu0
        %v964 = vsel %vm698, %v937, 0
        %v967 = vsel %vm705, %v941, 0
        %969 = vmatpush.bf16.msra.mxu0 0
        %970 = vmatpush.bf16.msra.mxu0 0
        %971 = vmatpush.bf16.msra.mxu0 0
        %972 = vmatpush.bf16.msra.mxu0 0
        %973 = vmatpush.bf16.msra.mxu0 0
        %974 = vmatpush.bf16.msra.mxu0 0
        %975 = vmatpush.bf16.msra.mxu0 0
        %976 = vmatpush.bf16.msra.mxu0 %v967
        %977 = vmatmul.bf16.gmra.mxu0 %v964
        %v978 = vpop.f32.mrf.mxu0
        %v979 = vadd.f32 %v960, %v978
        %v980 = vpop.f32.mrf.mxu0
        %981 = vdwg.mxu0
        %s982 = scalar_lea.vmem [#allocation10], 8
        %v983 = vld [vmem:[%s982] sm:$0xf]
        %v985 = vsel %vm698, %v939, 0
        %v988 = vsel %vm705, %v983, 0
        %990 = vmatpush.bf16.msra.mxu0 0
        %991 = vmatpush.bf16.msra.mxu0 0
        %992 = vmatpush.bf16.msra.mxu0 0
        %993 = vmatpush.bf16.msra.mxu0 0
        %994 = vmatpush.bf16.msra.mxu0 0
        %995 = vmatpush.bf16.msra.mxu0 0
        %996 = vmatpush.bf16.msra.mxu0 0
        %997 = vmatpush.bf16.msra.mxu0 %v988
        %998 = vmatmul.bf16.gmra.mxu0 %v985
        %v999 = vpop.f32.mrf.mxu0
        %v1000 = vadd.f32 0.0, %v999
        %v1001 = vpop.f32.mrf.mxu0
        %1002 = vdwg.mxu0
        %v1003 = vadd.f32 %v979, %v1000
        %s1004 = scalar_lea.vmem [#allocation10], 12
        %v1005 = vld [vmem:[%s1004] sm:$0xf]
        %v1007 = vsel %vm698, %v940, 0
        %v1010 = vsel %vm705, %v1005, 0
        %1012 = vmatpush.bf16.msra.mxu0 0
        %1013 = vmatpush.bf16.msra.mxu0 0
        %1014 = vmatpush.bf16.msra.mxu0 0
        %1015 = vmatpush.bf16.msra.mxu0 0
        %1016 = vmatpush.bf16.msra.mxu0 0
        %1017 = vmatpush.bf16.msra.mxu0 0
        %1018 = vmatpush.bf16.msra.mxu0 0
        %1019 = vmatpush.bf16.msra.mxu0 %v1010
        %1020 = vmatmul.bf16.gmra.mxu0 %v1007
        %v1021 = vpop.f32.mrf.mxu0
        %v1022 = vadd.f32 0.0, %v1021
        %v1023 = vpop.f32.mrf.mxu0
        %1024 = vdwg.mxu0
        %v1025 = vadd.f32 %v1003, %v1022
        %v1026 = vld [vmem:[%s10] sm:$0x1]
        %v1027 = vperm.slane %v1026, 0
        %v1028 = vadd.f32 %v1025, %v1027
        %v1029 = vld [vmem:[%s673] sm:$0xff]
        %v1030 = vadd.f32 %v1028, %v1029
        %v1031 = vld [vmem:[%s10 + $0x1] sm:$0x1]
        %v1032 = vld [vmem:[%s10 + $0x2] sm:$0x1]
        %vm1033 = vcmask 261120
        %v1034 = vsel %vm1033, %v1030, 0.0
        %1035 = vadd.xlane.f32.xlu0 %v1034
        %v1036 = vpop.xlane.xlu0 %1035
        %v1037 = vrcp.pop 32.0
        %v1038 = vmul.f32 32.0, %v1037
        %v1039 = vsub.f32 1.0, %v1038
        %v1040 = vmul.f32 %v1037, %v1039
        %v1041 = vadd.f32 %v1037, %v1040
        %vm1042 = vweird.f32 %v1037
        %v1043 = vsel %vm1042, %v1037, %v1041
        %v1044 = vmul.f32 %v1036, %v1043
        %v1045 = vsub.f32 %v1030, %v1044
        %v1046 = vmul.f32 %v1045, %v1045
        %v1047 = vsel %vm1033, %v1046, 0.0
        %1048 = vadd.xlane.f32.xlu0 %v1047
        %v1049 = vpop.xlane.xlu0 %1048
        %v1050 = vmul.f32 %v1049, %v1043
        %v1051 = vadd.f32 %v1050, 1e-05
        %v1052 = vrsqrt.pop %v1051
        %v1053 = vmul.f32 %v1052, %v1051
        %v1054 = vmul.f32 %v1053, %v1052
        %v1055 = vmul.f32 0.5, %v1054
        %v1056 = vsub.f32 1.5, %v1055
        %v1057 = vmul.f32 %v1052, %v1056
        %vm1058 = vweird.f32 %v1051
        %vm1059 = vweird.f32 %v1052
        %vm1060 = vmor %vm1058, %vm1059
        %v1061 = vsel %vm1060, %v1052, %v1057
        %v1062 = vmul.f32 %v1045, %v1061
        %v1063 = vperm.slane %v1031, 0
        %v1064 = vmul.f32 %v1062, %v1063
        %v1065 = vperm.slane %v1032, 0
        %v1066 = vadd.f32 %v1064, %v1065
        %v1067 = vpack.c.bf16 %v1066, %v1066
        %v1068 = vld [vmem:[#allocation12] sm:$0xf]
        %v1069 = vld [vmem:[#allocation12 + $0x4] sm:$0xf]
        %v1070 = vld [vmem:[#allocation12 + $0x8] sm:$0xf]
        %v1071 = vld [vmem:[#allocation12 + $0xc] sm:$0xf]
        %v1072 = vld [vmem:[#allocation13] sm:$0x1]
        %v1074 = vperm.slane %v1072, 0
        %v1080 = vunpack.c.l.b16 %v1068
        %v1081 = vunpack.c.l.b16 %v1069
        %v1082 = vunpack.c.l.b16 %v1070
        %v1083 = vunpack.c.l.b16 %v1071
        %v1084 = vpack.c.b16 %v1081, %v1080
        %v1085 = vpack.c.b16 %v1083, %v1082
        %v1089 = vsel %vm1033, %v1067, 0
        %1091 = vmatpush.bf16.msra.mxu0 0
        %1092 = vmatpush.bf16.msra.mxu0 0
        %1093 = vmatpush.bf16.msra.mxu0 0
        %1094 = vmatpush.bf16.msra.mxu0 0
        %1095 = vmatpush.bf16.msra.mxu0 0
        %1096 = vmatpush.bf16.msra.mxu0 0
        %1097 = vmatpush.bf16.msra.mxu0 %v1085
        %1098 = vmatpush.bf16.msra.mxu0 %v1084
        %1099 = vmatmul.bf16.gmra.mxu0 %v1089
        %v1100 = vpop.f32.mrf.mxu0
        %v1101 = vadd.f32 %v1074, %v1100
        %v1102 = vpop.f32.mrf.mxu0
        %1103 = vdwg.mxu0
        %v1104 = vmax.f32 %v1101, 0.0
        %v1105 = vpack.c.bf16 %v1104, %v1104
        %v1106 = vld [vmem:[%s8] sm:$0xf]
        %v1107 = vld [vmem:[%s8 + $0x4] sm:$0xf]
        %v1108 = vld [vmem:[%s8 + $0x8] sm:$0xf]
        %v1109 = vld [vmem:[%s8 + $0xc] sm:$0xf]
        %v1110 = vld [vmem:[%s8 + $0x10] sm:$0xf]
        %v1111 = vld [vmem:[%s8 + $0x14] sm:$0xf]
        %v1112 = vld [vmem:[%s8 + $0x18] sm:$0xf]
        %v1113 = vld [vmem:[%s8 + $0x1c] sm:$0xf]
        %v1114 = vld [vmem:[%s8 + $0x20] sm:$0xf]
        %v1115 = vld [vmem:[%s8 + $0x24] sm:$0xf]
        %v1116 = vld [vmem:[%s8 + $0x28] sm:$0xf]
        %v1117 = vld [vmem:[%s8 + $0x2c] sm:$0xf]
        %v1118 = vld [vmem:[%s8 + $0x30] sm:$0xf]
        %v1119 = vld [vmem:[%s8 + $0x34] sm:$0xf]
        %v1120 = vld [vmem:[%s8 + $0x38] sm:$0xf]
        %v1121 = vld [vmem:[%s8 + $0x3c] sm:$0xf]
        %v1122 = vld [vmem:[%s10 + $0x3] sm:$0x1]
        %v1123 = vperm.slane %v1122, 0
        %v1140 = vunpack.c.l.b16 %v1106
        %v1141 = vunpack.c.l.b16 %v1107
        %v1142 = vunpack.c.l.b16 %v1108
        %v1143 = vunpack.c.l.b16 %v1109
        %v1144 = vunpack.c.l.b16 %v1110
        %v1145 = vunpack.c.l.b16 %v1111
        %v1146 = vunpack.c.l.b16 %v1112
        %v1147 = vunpack.c.l.b16 %v1113
        %v1148 = vunpack.c.l.b16 %v1114
        %v1149 = vunpack.c.l.b16 %v1115
        %v1150 = vunpack.c.l.b16 %v1116
        %v1151 = vunpack.c.l.b16 %v1117
        %v1152 = vunpack.c.l.b16 %v1118
        %v1153 = vunpack.c.l.b16 %v1119
        %v1154 = vunpack.c.l.b16 %v1120
        %v1155 = vunpack.c.l.b16 %v1121
        %v1156 = vpack.c.b16 %v1141, %v1140
        %v1157 = vpack.c.b16 %v1143, %v1142
        %v1158 = vpack.c.b16 %v1145, %v1144
        %v1159 = vpack.c.b16 %v1147, %v1146
        %v1160 = vpack.c.b16 %v1149, %v1148
        %v1161 = vpack.c.b16 %v1151, %v1150
        %v1162 = vpack.c.b16 %v1153, %v1152
        %v1163 = vpack.c.b16 %v1155, %v1154
        %1172 = vmatpush.bf16.msra.mxu0 %v1163
        %1173 = vmatpush.bf16.msra.mxu0 %v1162
        %1174 = vmatpush.bf16.msra.mxu0 %v1161
        %1175 = vmatpush.bf16.msra.mxu0 %v1160
        %1176 = vmatpush.bf16.msra.mxu0 %v1159
        %1177 = vmatpush.bf16.msra.mxu0 %v1158
        %1178 = vmatpush.bf16.msra.mxu0 %v1157
        %1179 = vmatpush.bf16.msra.mxu0 %v1156
        %1180 = vmatmul.bf16.gmra.mxu0 %v1105
        %v1181 = vpop.f32.mrf.mxu0
        %v1182 = vadd.f32 %v1123, %v1181
        %v1183 = vpop.f32.mrf.mxu0
        %1184 = vdwg.mxu0
        %v1185 = vadd.f32 %v1182, %v1066
        %v1186 = vld [vmem:[%s10 + $0x4] sm:$0x1]
        %v1187 = vld [vmem:[%s10 + $0x5] sm:$0x1]
        %v1188 = vsel %vm1033, %v1185, 0.0
        %1189 = vadd.xlane.f32.xlu0 %v1188
        %v1190 = vpop.xlane.xlu0 %1189
        %v1191 = vmul.f32 %v1190, %v1043
        %v1192 = vsub.f32 %v1185, %v1191
        %v1193 = vmul.f32 %v1192, %v1192
        %v1194 = vsel %vm1033, %v1193, 0.0
        %1195 = vadd.xlane.f32.xlu0 %v1194
        %v1196 = vpop.xlane.xlu0 %1195
        %v1197 = vmul.f32 %v1196, %v1043
        %v1198 = vadd.f32 %v1197, 1e-05
        %v1199 = vrsqrt.pop %v1198
        %v1200 = vmul.f32 %v1199, %v1198
        %v1201 = vmul.f32 %v1200, %v1199
        %v1202 = vmul.f32 0.5, %v1201
        %v1203 = vsub.f32 1.5, %v1202
        %v1204 = vmul.f32 %v1199, %v1203
        %vm1205 = vweird.f32 %v1198
        %vm1206 = vweird.f32 %v1199
        %vm1207 = vmor %vm1205, %vm1206
        %v1208 = vsel %vm1207, %v1199, %v1204
        %v1209 = vmul.f32 %v1192, %v1208
        %v1210 = vperm.slane %v1186, 0
        %v1211 = vmul.f32 %v1209, %v1210
        %v1212 = vperm.slane %v1187, 0
        %v1213 = vadd.f32 %v1211, %v1212
        %1214 = vst.msk [vmem:[%s669] sm:$0xff] %vm1033, %v1213
        %s1215 = sand.u32 %s297, 1
        %s1216 = scalar_lea.sflag [#allocation6], %s1215
        %s1217 = sand.u32 %s297, 1
        %s1218 = smul.addr %s1217, 8
        %s1219 = scalar_lea.vmem [#allocation15], %s1218
        // Predicated region
        $region171: #{tpu_custom_call.1} parent=137 // pred_check
          %p1220 = pneg %p307
        $region172: #{tpu_custom_call.1} parent=137 // pred_check_branch
          %1222 = sbr.rel (%p1220) target = $region174
        $region173: #{tpu_custom_call.1} parent=137 // pred_region
          %1224 = vsyncadd %s1216, 0
          %s1225 = smul.addr %s33, 8
          %s1226 = scalar_lea.hbm %s11, %s1225
          %s1228 = sshll.u32 %s1219, 4
          %s1229 = int_to_ptr.vmem [resolvable:$true] %s1228
          %s1230 = sshll.u32 %s1226, 4
          %s1231 = int_to_ptr.hbm [resolvable:$true] %s1230
          %1233 = dma.vmem_to_hbm [thread:$0]  %s1229, 128, %s1231, %s1216
        $region174: #{tpu_custom_call.1} parent=137 // pred_fallthru
          _
      $region138: #{tpu_custom_call.1} parent=5 // pred_fallthru
        _
      %p1234 = scmp.le.s32.totalorder 2, %s28
      // Predicated region
      $region175: #{tpu_custom_call.1} parent=5 // pred_check
        %p1235 = pneg %p1234
      $region176: #{tpu_custom_call.1} parent=5 // pred_check_branch
        %1237 = sbr.rel (%p1235) target = $region178
      $region177: #{tpu_custom_call.1} parent=5 // pred_region
        %s1238 = ssub.s32 %s28, 2
        // Predicated region
        $region179: #{tpu_custom_call.1} parent=177 // pred_check
          %p1239 = pneg %p313
        $region180: #{tpu_custom_call.1} parent=177 // pred_check_branch
          %1241 = sbr.rel (%p1239) target = $region182
        $region181: #{tpu_custom_call.1} parent=177 // pred_region
          %s1242 = sand.u32 %s298, 1
          %s1243 = scalar_lea.sflag [#allocation6], %s1242
          %s1244 = sand.u32 %s298, 1
          %s1245 = smul.addr %s1244, 8
          %s1246 = scalar_lea.vmem [#allocation15], %s1245
          %1248 = dma.done %s1243, 128
        $region182: #{tpu_custom_call.1} parent=177 // pred_fallthru
          _
      $region178: #{tpu_custom_call.1} parent=5 // pred_fallthru
        _
    $region6: #{tpu_custom_call.1} parent=1 // loop_footer
      %s32 = sadd.s32 1, %s28
    $region7: #{tpu_custom_call.1} parent=1 // loop_footer_branch
      %27 = sbr.rel target = $region3
    $region8: #{tpu_custom_call.1} parent=1 // loop_exit
      _
    %1249 = vsyncpa [#allocation5], 1
    %s1250 = scalar_lea.sflag [#allocation5], 1
    %1251 = vsyncpa %s1250, 1
    %1252 = vsyncpa [#allocation8], 1
    %s1253 = scalar_lea.sflag [#allocation8], 1
    %1254 = vsyncpa %s1253, 1
    %1255 = vsyncpa [#allocation11], 1
    %1256 = vsyncpa [#allocation14], 1
    %1257 = vsyncpa [#allocation6], 1
    %s1258 = scalar_lea.sflag [#allocation6], 1
    %1259 = vsyncpa %s1258, 1

</llo_original>
